<compile_context>
chip_gen: v5e
topology: v5e:2x2
jax: 0.10.0
libtpu: 0.0.40
codegen_flags: <defaults>
</compile_context>

<pallas_src>
import functools

import numpy as np

import jax
import jax.numpy as jnp
from jax.experimental import pallas as pl
from jax.experimental.pallas import tpu as pltpu


_CPAD = 8  # conv input channels padded to one full f32 sublane tile


# ---------------------------------------------------------------------------
# Host-side constant builders (trace-time numpy; embedded as VMEM constants)
# ---------------------------------------------------------------------------
def _conv_masks(n, h, w):
    """(9, N*H*W) 0/1 masks for the 9 taps of a 3x3 'same' conv.

    Tap t = (dy+1)*3 + (dx+1) reads position (y+dy, x+dx); the mask kills taps
    outside the image, which also kills the circular wrap / cross-sample
    contamination introduced by pltpu.roll.
    """
    ys, xs = np.meshgrid(np.arange(h), np.arange(w), indexing="ij")
    mask = np.zeros((9, n * h * w), np.float32)
    t = 0
    for dy in (-1, 0, 1):
        for dx in (-1, 0, 1):
            valid = ((ys + dy >= 0) & (ys + dy < h) &
                     (xs + dx >= 0) & (xs + dx < w))
            mask[t] = np.tile(valid.reshape(-1).astype(np.float32), n)
            t += 1
    return mask


def _pool_decimation(n, h, w):
    """(N*H*W, N*(H//2)*(W//2)) one-hot matrix keeping even-(y, x) columns."""
    ho, wo = h // 2, w // 2
    mat = np.zeros((n * h * w, n * ho * wo), np.float32)
    for b in range(n):
        for yo in range(ho):
            for xo in range(wo):
                mat[b * h * w + (2 * yo) * w + 2 * xo,
                    b * ho * wo + yo * wo + xo] = 1.0
    return mat


def _pool_avg_combined(n, h, w):
    """Fused (2x2 maxpool decimation) + (adaptive avg pool -> 2x2) matrix.

    Maps the roll-maxed (C, N*h*w) map straight to (C, 4*N) with columns ordered
    s*N + b (s = 2x2 output cell), so the linear stage uses contiguous slices.
    Entries are 0 or 1/(window) — exact in bf16 for power-of-two windows.
    """
    hp, wp = h // 2, w // 2          # after the 2x2 max pool
    ah, aw = max(hp // 2, 1), max(wp // 2, 1)   # adaptive-avg window
    out = np.zeros((n * h * w, 4 * n), np.float32)
    for b in range(n):
        for yo in range(hp):
            for xo in range(wp):
                s = (yo // ah) * 2 + (xo // aw)
                out[b * h * w + (2 * yo) * w + 2 * xo, s * n + b] += 1.0 / (ah * aw)
    return out


# ---------------------------------------------------------------------------
# In-kernel building blocks
# ---------------------------------------------------------------------------
def _conv3x3_relu(x, w_ref, b_ref, mask_ref, *, w):
    """3x3 'same' conv + ReLU on (8, M) -> (Cout, M), one K=72 bf16 MXU matmul."""
    m = x.shape[1]
    taps = []
    t = 0
    for dy in (-1, 0, 1):
        for dx in (-1, 0, 1):
            off = dy * w + dx
            if off == 0:
                tap = x                                    # center tap, always valid
            else:
                tap = pltpu.roll(x, shift=(-off) % m, axis=1)      # XLU lane shift
                tap = tap * mask_ref[pl.ds(t, 1), :]               # boundary mask
            taps.append(tap)
            t += 1
    stack = jnp.concatenate(taps, axis=0).astype(jnp.bfloat16)     # (72, M)
    acc = jnp.dot(w_ref[...], stack, preferred_element_type=jnp.float32)
    return jnp.maximum(acc + b_ref[...], 0.0)                      # fused bias + ReLU


def _maxpool2x2(x, post_ref, *, w):
    """2x2/2 max pool: roll+max pairs, then a single bf16 decimation matmul."""
    m = x.shape[1]
    t = jnp.maximum(x, pltpu.roll(x, shift=m - 1, axis=1))   # max(x[p], x[p+1])
    t = jnp.maximum(t, pltpu.roll(t, shift=m - w, axis=1))   # max over the row pair
    return jnp.dot(t.astype(jnp.bfloat16), post_ref[...],
                   preferred_element_type=jnp.float32)


def _encoder_kernel(x_ref, w1_ref, b1_ref, w2_ref, b2_ref, w3_ref, b3_ref,
                    m0_ref, m1_ref, d1_ref, g2_ref, wl_ref, bl_ref,
                    gamma_ref, beta_ref, out_ref, x0_ref,
                    *, n, cin, h, w, eps):
    hw = h * w

    # ---- NCHW -> channel-padded (8, N*H*W) layout, folded into the kernel ----
    if cin < _CPAD:
        x0_ref[cin:, :] = jnp.zeros((_CPAD - cin, n * hw), jnp.float32)  # pad rows only
    for b in range(n):
        x0_ref[0:cin, b * hw:(b + 1) * hw] = x_ref[b]

    # ---- VGG-style feature extractor (activations stay in vregs/VMEM) ----
    y = _conv3x3_relu(x0_ref[...], w1_ref, b1_ref, m0_ref, w=w)      # (8,  N*H*W)
    y = _conv3x3_relu(y, w2_ref, b2_ref, m0_ref, w=w)                # (8,  N*H*W)
    y = _maxpool2x2(y, d1_ref, w=w)                                  # (8,  N*H*W/4)
    y = _conv3x3_relu(y, w3_ref, b3_ref, m1_ref, w=w // 2)           # (16, N*H*W/4)
    # 2x2 max pool + adaptive avg pool (-> 2x2); decimation+avg fused in g2
    y = _maxpool2x2(y, g2_ref, w=w // 2)                             # (16, 4*N)

    # ---- flatten (NCHW order) + Linear as ONE K = 4*C3 matmul ----
    z = jnp.concatenate([y[:, s * n:(s + 1) * n] for s in range(4)], axis=0)  # (4*C3, N)
    lin = jnp.dot(wl_ref[...], z, preferred_element_type=jnp.float32) + bl_ref[...]

    # ---- BatchNorm1d (training-mode batch statistics; batch axis = lanes) ----
    mean = jnp.mean(lin, axis=1, keepdims=True)
    var = jnp.mean(jnp.square(lin - mean), axis=1, keepdims=True)
    out_ref[...] = ((lin - mean) * jax.lax.rsqrt(var + eps)
                    * gamma_ref[...] + beta_ref[...])


# ---------------------------------------------------------------------------
# Parameters + forward wrapper
# ---------------------------------------------------------------------------
def init_encoder_params(key, embed_size=32):
    ks = jax.random.split(key, 4)
    p = {}
    # TODO(synk): pretrained VGG19 weights are unavailable here; a small random
    # VGG-style backbone stands in for the frozen feature extractor.
    p["w1"] = jax.random.normal(ks[0], (8, 3, 3, 3), jnp.float32) * (2.0 / 27) ** 0.5
    p["b1"] = jnp.zeros((8,), jnp.float32)
    p["w2"] = jax.random.normal(ks[1], (8, 8, 3, 3), jnp.float32) * (2.0 / 72) ** 0.5
    p["b2"] = jnp.zeros((8,), jnp.float32)
    p["w3"] = jax.random.normal(ks[2], (16, 8, 3, 3), jnp.float32) * (2.0 / 72) ** 0.5
    p["b3"] = jnp.zeros((16,), jnp.float32)
    feat_dim = 16 * 2 * 2
    # Linear: weight ~ N(0, 0.2), bias = 0 (matches init_weights()).
    p["w_lin"] = jax.random.normal(ks[3], (feat_dim, embed_size), jnp.float32) * 0.2
    p["b_lin"] = jnp.zeros((embed_size,), jnp.float32)
    # BatchNorm1d affine params (momentum only affects running stats).
    p["gamma"] = jnp.ones((embed_size,), jnp.float32)
    p["beta"] = jnp.zeros((embed_size,), jnp.float32)
    return p


def _conv_weight_cat(w_oihw, cpad=_CPAD):
    """OIHW conv weight -> (Cout, 9*cpad) bf16, column index t*cpad + cin."""
    co, ci = w_oihw.shape[0], w_oihw.shape[1]
    wt = jnp.transpose(w_oihw, (2, 3, 0, 1))                       # (3, 3, Cout, Cin)
    wt = jnp.pad(wt, ((0, 0), (0, 0), (0, 0), (0, cpad - ci)))
    wt = jnp.transpose(wt.reshape(9, co, cpad), (1, 0, 2))         # (Cout, 9, cpad)
    return wt.reshape(co, 9 * cpad).astype(jnp.bfloat16)


def encoder_cnn_forward(params, images_nchw, *, eps=1e-5):
    n, cin, h, w = images_nchw.shape
    assert h == w and h % 8 == 0 and cin <= _CPAD, "square H=W divisible by 8"
    embed = params["w_lin"].shape[1]
    c3 = params["w3"].shape[0]
    hw = h * w

    # The only wrapper-side data op is a FREE contiguous reshape; the
    # NCHW -> (C, N*H*W) permutation + channel padding happen inside the kernel.
    x3 = images_nchw.astype(jnp.float32).reshape(n, cin, hw)

    w1 = _conv_weight_cat(params["w1"])
    w2 = _conv_weight_cat(params["w2"])
    w3 = _conv_weight_cat(params["w3"])
    b1 = params["b1"].reshape(-1, 1)
    b2 = params["b2"].reshape(-1, 1)
    b3 = params["b3"].reshape(-1, 1)

    # Host-built constants: boundary masks (f32) plus pool decimation and fused
    # decimation+avg matrices (bf16 — one-hot / 0.25 values are exact).
    mask0 = jnp.asarray(_conv_masks(n, h, w))
    mask1 = jnp.asarray(_conv_masks(n, h // 2, w // 2))
    dec1 = jnp.asarray(_pool_decimation(n, h, w), dtype=jnp.bfloat16)
    g2 = jnp.asarray(_pool_avg_combined(n, h // 2, w // 2), dtype=jnp.bfloat16)

    # Linear weight (feat, embed) with feat ordered (c, s) NCHW-flatten-style:
    # reorder to (embed, 4*C3), column index s*C3 + c, to match the kernel's
    # concatenated (4*C3, N) operand.
    wl = jnp.transpose(params["w_lin"].reshape(c3, 4, embed),
                       (2, 1, 0)).reshape(embed, 4 * c3)
    bl = params["b_lin"].reshape(-1, 1)
    gamma = params["gamma"].reshape(-1, 1)
    beta = params["beta"].reshape(-1, 1)

    kernel = functools.partial(_encoder_kernel, n=n, cin=cin, h=h, w=w, eps=eps)

    # TODO(synk): at real VGG scale (224x224, 512 ch) this gridless call must
    # become a grid over batch/spatial tiles (dimension_semantics=("parallel",...)
    # for both v7x TensorCores, vmem_limit_bytes budgeted for v7x's 64 MiB VMEM)
    # and the pool decimation matrices — quadratic in N*H*W — replaced with
    # strided-scratch decimation.
    out_en = pl.pallas_call(
        kernel,
        out_shape=jax.ShapeDtypeStruct((embed, n), jnp.float32),
        scratch_shapes=[pltpu.VMEM((_CPAD, n * hw), jnp.float32)],  # padded input stage
    )(x3, w1, b1, w2, b2, w3, b3, mask0, mask1, dec1, g2, wl, bl, gamma, beta)

    # TODO(synk): the final (E, N) -> (N, E) transpose stays in the wrapper — a
    # standalone in-kernel transpose of the lane-sparse (32, 2) tile has no cheap
    # Mosaic lowering, and keeping batch on lanes makes the BatchNorm1d
    # reduction a plain lane reduction.
    return out_en.T


if __name__ == "__main__":
    key = jax.random.PRNGKey(0)
    k_img, k_par = jax.random.split(key)
    images = jax.random.normal(k_img, (2, 3, 16, 16), jnp.float32)  # NCHW
    params = init_encoder_params(k_par, embed_size=32)

    fwd = jax.jit(encoder_cnn_forward)
    out = jax.block_until_ready(fwd(params, images))

    assert out.shape == (2, 32) and out.dtype == jnp.float32
    assert bool(jnp.isfinite(out).all())
    print("KERNEL_OK")
</pallas_src>

<mosaic_0001>
module attributes {stable_mosaic.version = 11 : i64} {
  func.func @_encoder_kernel(%arg0: memref<2x3x256xf32, #tpu.memory_space<vmem>>, %arg1: memref<8x72xbf16, #tpu.memory_space<vmem>>, %arg2: memref<8x1xf32, #tpu.memory_space<vmem>>, %arg3: memref<8x72xbf16, #tpu.memory_space<vmem>>, %arg4: memref<8x1xf32, #tpu.memory_space<vmem>>, %arg5: memref<16x72xbf16, #tpu.memory_space<vmem>>, %arg6: memref<16x1xf32, #tpu.memory_space<vmem>>, %arg7: memref<9x512xf32, #tpu.memory_space<vmem>>, %arg8: memref<9x128xf32, #tpu.memory_space<vmem>>, %arg9: memref<512x128xbf16, #tpu.memory_space<vmem>>, %arg10: memref<128x8xbf16, #tpu.memory_space<vmem>>, %arg11: memref<32x64xf32, #tpu.memory_space<vmem>>, %arg12: memref<32x1xf32, #tpu.memory_space<vmem>>, %arg13: memref<32x1xf32, #tpu.memory_space<vmem>>, %arg14: memref<32x1xf32, #tpu.memory_space<vmem>>, %arg15: memref<32x2xf32, #tpu.memory_space<vmem>>, %arg16: memref<8x512xf32, #tpu.memory_space<vmem>>) attributes {dimension_semantics = [], scalar_prefetch = 0 : i64, scratch_operands = 1 : i64, tpu.core_type = #tpu.core_type<tc>} {
    %cst = arith.constant 0.000000e+00 : f32
    %0 = vector.broadcast %cst : f32 to vector<5x512xf32>
    %c3 = arith.constant 3 : index
    %c0 = arith.constant 0 : index
    %1 = vector.load %arg16[%c3, %c0] : memref<8x512xf32, #tpu.memory_space<vmem>>, vector<5x512xf32>
    tpu.vector_store %arg16[%c3, %c0], %0 {strides = array<i32>} : memref<8x512xf32, #tpu.memory_space<vmem>>, vector<5x512xf32>,
    %c0_0 = arith.constant 0 : index
    %c0_1 = arith.constant 0 : index
    %c0_2 = arith.constant 0 : index
    %2 = vector.load %arg0[%c0_0, %c0_1, %c0_2] : memref<2x3x256xf32, #tpu.memory_space<vmem>>, vector<1x3x256xf32>
    %3 = vector.shape_cast %2 : vector<1x3x256xf32> to vector<3x256xf32>
    %c0_3 = arith.constant 0 : index
    %c0_4 = arith.constant 0 : index
    %4 = vector.load %arg16[%c0_3, %c0_4] : memref<8x512xf32, #tpu.memory_space<vmem>>, vector<3x256xf32>
    tpu.vector_store %arg16[%c0_3, %c0_4], %3 {strides = array<i32>} : memref<8x512xf32, #tpu.memory_space<vmem>>, vector<3x256xf32>,
    %c1 = arith.constant 1 : index
    %c0_5 = arith.constant 0 : index
    %c0_6 = arith.constant 0 : index
    %5 = vector.load %arg0[%c1, %c0_5, %c0_6] : memref<2x3x256xf32, #tpu.memory_space<vmem>>, vector<1x3x256xf32>
    %6 = vector.shape_cast %5 : vector<1x3x256xf32> to vector<3x256xf32>
    %c0_7 = arith.constant 0 : index
    %c256 = arith.constant 256 : index
    %7 = vector.load %arg16[%c0_7, %c256] : memref<8x512xf32, #tpu.memory_space<vmem>>, vector<3x256xf32>
    tpu.vector_store %arg16[%c0_7, %c256], %6 {strides = array<i32>} : memref<8x512xf32, #tpu.memory_space<vmem>>, vector<3x256xf32>,
    %c0_8 = arith.constant 0 : index
    %c0_9 = arith.constant 0 : index
    %8 = vector.load %arg16[%c0_8, %c0_9] : memref<8x512xf32, #tpu.memory_space<vmem>>, vector<8x512xf32>
    %c17_i32 = arith.constant 17 : i32
    %9 = tpu.dynamic_rotate %8 by %c17_i32 dim 1 : vector<8x512xf32>, i32 -> vector<8x512xf32>
    %c0_10 = arith.constant 0 : index
    %c0_11 = arith.constant 0 : index
    %10 = vector.load %arg7[%c0_10, %c0_11] : memref<9x512xf32, #tpu.memory_space<vmem>>, vector<1x512xf32>
    %11 = vector.broadcast %10 : vector<1x512xf32> to vector<8x512xf32>
    %12 = arith.mulf %9, %11 : vector<8x512xf32>
    %c16_i32 = arith.constant 16 : i32
    %13 = tpu.dynamic_rotate %8 by %c16_i32 dim 1 : vector<8x512xf32>, i32 -> vector<8x512xf32>
    %c1_12 = arith.constant 1 : index
    %c0_13 = arith.constant 0 : index
    %14 = vector.load %arg7[%c1_12, %c0_13] : memref<9x512xf32, #tpu.memory_space<vmem>>, vector<1x512xf32>
    %15 = vector.broadcast %14 : vector<1x512xf32> to vector<8x512xf32>
    %16 = arith.mulf %13, %15 : vector<8x512xf32>
    %c15_i32 = arith.constant 15 : i32
    %17 = tpu.dynamic_rotate %8 by %c15_i32 dim 1 : vector<8x512xf32>, i32 -> vector<8x512xf32>
    %c2 = arith.constant 2 : index
    %c0_14 = arith.constant 0 : index
    %18 = vector.load %arg7[%c2, %c0_14] : memref<9x512xf32, #tpu.memory_space<vmem>>, vector<1x512xf32>
    %19 = vector.broadcast %18 : vector<1x512xf32> to vector<8x512xf32>
    %20 = arith.mulf %17, %19 : vector<8x512xf32>
    %c1_i32 = arith.constant 1 : i32
    %21 = tpu.dynamic_rotate %8 by %c1_i32 dim 1 : vector<8x512xf32>, i32 -> vector<8x512xf32>
    %c3_15 = arith.constant 3 : index
    %c0_16 = arith.constant 0 : index
    %22 = vector.load %arg7[%c3_15, %c0_16] : memref<9x512xf32, #tpu.memory_space<vmem>>, vector<1x512xf32>
    %23 = vector.broadcast %22 : vector<1x512xf32> to vector<8x512xf32>
    %24 = arith.mulf %21, %23 : vector<8x512xf32>
    %c511_i32 = arith.constant 511 : i32
    %25 = tpu.dynamic_rotate %8 by %c511_i32 dim 1 : vector<8x512xf32>, i32 -> vector<8x512xf32>
    %c5 = arith.constant 5 : index
    %c0_17 = arith.constant 0 : index
    %26 = vector.load %arg7[%c5, %c0_17] : memref<9x512xf32, #tpu.memory_space<vmem>>, vector<1x512xf32>
    %27 = vector.broadcast %26 : vector<1x512xf32> to vector<8x512xf32>
    %28 = arith.mulf %25, %27 : vector<8x512xf32>
    %c497_i32 = arith.constant 497 : i32
    %29 = tpu.dynamic_rotate %8 by %c497_i32 dim 1 : vector<8x512xf32>, i32 -> vector<8x512xf32>
    %c6 = arith.constant 6 : index
    %c0_18 = arith.constant 0 : index
    %30 = vector.load %arg7[%c6, %c0_18] : memref<9x512xf32, #tpu.memory_space<vmem>>, vector<1x512xf32>
    %31 = vector.broadcast %30 : vector<1x512xf32> to vector<8x512xf32>
    %32 = arith.mulf %29, %31 : vector<8x512xf32>
    %c496_i32 = arith.constant 496 : i32
    %33 = tpu.dynamic_rotate %8 by %c496_i32 dim 1 : vector<8x512xf32>, i32 -> vector<8x512xf32>
    %c7 = arith.constant 7 : index
    %c0_19 = arith.constant 0 : index
    %34 = vector.load %arg7[%c7, %c0_19] : memref<9x512xf32, #tpu.memory_space<vmem>>, vector<1x512xf32>
    %35 = vector.broadcast %34 : vector<1x512xf32> to vector<8x512xf32>
    %36 = arith.mulf %33, %35 : vector<8x512xf32>
    %c495_i32 = arith.constant 495 : i32
    %37 = tpu.dynamic_rotate %8 by %c495_i32 dim 1 : vector<8x512xf32>, i32 -> vector<8x512xf32>
    %c8 = arith.constant 8 : index
    %c0_20 = arith.constant 0 : index
    %38 = vector.load %arg7[%c8, %c0_20] : memref<9x512xf32, #tpu.memory_space<vmem>>, vector<1x512xf32>
    %39 = vector.broadcast %38 : vector<1x512xf32> to vector<8x512xf32>
    %40 = arith.mulf %37, %39 : vector<8x512xf32>
    %41 = tpu.concatenate %12, %16, %20, %24, %8, %28, %32, %36, %40 in 0 : vector<8x512xf32>, vector<8x512xf32>, vector<8x512xf32>, vector<8x512xf32>, vector<8x512xf32>, vector<8x512xf32>, vector<8x512xf32>, vector<8x512xf32>, vector<8x512xf32> -> vector<72x512xf32>
    %42 = arith.truncf %41 : vector<72x512xf32> to vector<72x512xbf16>
    %c0_21 = arith.constant 0 : index
    %c0_22 = arith.constant 0 : index
    %43 = vector.load %arg1[%c0_21, %c0_22] : memref<8x72xbf16, #tpu.memory_space<vmem>>, vector<8x72xbf16>
    %cst_23 = arith.constant dense<0.000000e+00> : vector<8x512xf32>
    %44 = tpu.matmul %43, %42, %cst_23 {dimension_numbers = #tpu.dot_dimension_numbers<[1], [0], [0], [1], [0, 0, 1, 1], [], []>} : vector<8x72xbf16>, vector<72x512xbf16>, vector<8x512xf32> -> vector<8x512xf32>
    %c0_24 = arith.constant 0 : index
    %c0_25 = arith.constant 0 : index
    %45 = vector.load %arg2[%c0_24, %c0_25] : memref<8x1xf32, #tpu.memory_space<vmem>>, vector<8x1xf32>
    %46 = vector.broadcast %45 : vector<8x1xf32> to vector<8x512xf32>
    %47 = arith.addf %44, %46 : vector<8x512xf32>
    %cst_26 = arith.constant 0.000000e+00 : f32
    %48 = vector.broadcast %cst_26 : f32 to vector<8x512xf32>
    %49 = arith.maximumf %47, %48 : vector<8x512xf32>
    %c17_i32_27 = arith.constant 17 : i32
    %50 = tpu.dynamic_rotate %49 by %c17_i32_27 dim 1 : vector<8x512xf32>, i32 -> vector<8x512xf32>
    %c0_28 = arith.constant 0 : index
    %c0_29 = arith.constant 0 : index
    %51 = vector.load %arg7[%c0_28, %c0_29] : memref<9x512xf32, #tpu.memory_space<vmem>>, vector<1x512xf32>
    %52 = vector.broadcast %51 : vector<1x512xf32> to vector<8x512xf32>
    %53 = arith.mulf %50, %52 : vector<8x512xf32>
    %c16_i32_30 = arith.constant 16 : i32
    %54 = tpu.dynamic_rotate %49 by %c16_i32_30 dim 1 : vector<8x512xf32>, i32 -> vector<8x512xf32>
    %c1_31 = arith.constant 1 : index
    %c0_32 = arith.constant 0 : index
    %55 = vector.load %arg7[%c1_31, %c0_32] : memref<9x512xf32, #tpu.memory_space<vmem>>, vector<1x512xf32>
    %56 = vector.broadcast %55 : vector<1x512xf32> to vector<8x512xf32>
    %57 = arith.mulf %54, %56 : vector<8x512xf32>
    %c15_i32_33 = arith.constant 15 : i32
    %58 = tpu.dynamic_rotate %49 by %c15_i32_33 dim 1 : vector<8x512xf32>, i32 -> vector<8x512xf32>
    %c2_34 = arith.constant 2 : index
    %c0_35 = arith.constant 0 : index
    %59 = vector.load %arg7[%c2_34, %c0_35] : memref<9x512xf32, #tpu.memory_space<vmem>>, vector<1x512xf32>
    %60 = vector.broadcast %59 : vector<1x512xf32> to vector<8x512xf32>
    %61 = arith.mulf %58, %60 : vector<8x512xf32>
    %c1_i32_36 = arith.constant 1 : i32
    %62 = tpu.dynamic_rotate %49 by %c1_i32_36 dim 1 : vector<8x512xf32>, i32 -> vector<8x512xf32>
    %c3_37 = arith.constant 3 : index
    %c0_38 = arith.constant 0 : index
    %63 = vector.load %arg7[%c3_37, %c0_38] : memref<9x512xf32, #tpu.memory_space<vmem>>, vector<1x512xf32>
    %64 = vector.broadcast %63 : vector<1x512xf32> to vector<8x512xf32>
    %65 = arith.mulf %62, %64 : vector<8x512xf32>
    %c511_i32_39 = arith.constant 511 : i32
    %66 = tpu.dynamic_rotate %49 by %c511_i32_39 dim 1 : vector<8x512xf32>, i32 -> vector<8x512xf32>
    %c5_40 = arith.constant 5 : index
    %c0_41 = arith.constant 0 : index
    %67 = vector.load %arg7[%c5_40, %c0_41] : memref<9x512xf32, #tpu.memory_space<vmem>>, vector<1x512xf32>
    %68 = vector.broadcast %67 : vector<1x512xf32> to vector<8x512xf32>
    %69 = arith.mulf %66, %68 : vector<8x512xf32>
    %c497_i32_42 = arith.constant 497 : i32
    %70 = tpu.dynamic_rotate %49 by %c497_i32_42 dim 1 : vector<8x512xf32>, i32 -> vector<8x512xf32>
    %c6_43 = arith.constant 6 : index
    %c0_44 = arith.constant 0 : index
    %71 = vector.load %arg7[%c6_43, %c0_44] : memref<9x512xf32, #tpu.memory_space<vmem>>, vector<1x512xf32>
    %72 = vector.broadcast %71 : vector<1x512xf32> to vector<8x512xf32>
    %73 = arith.mulf %70, %72 : vector<8x512xf32>
    %c496_i32_45 = arith.constant 496 : i32
    %74 = tpu.dynamic_rotate %49 by %c496_i32_45 dim 1 : vector<8x512xf32>, i32 -> vector<8x512xf32>
    %c7_46 = arith.constant 7 : index
    %c0_47 = arith.constant 0 : index
    %75 = vector.load %arg7[%c7_46, %c0_47] : memref<9x512xf32, #tpu.memory_space<vmem>>, vector<1x512xf32>
    %76 = vector.broadcast %75 : vector<1x512xf32> to vector<8x512xf32>
    %77 = arith.mulf %74, %76 : vector<8x512xf32>
    %c495_i32_48 = arith.constant 495 : i32
    %78 = tpu.dynamic_rotate %49 by %c495_i32_48 dim 1 : vector<8x512xf32>, i32 -> vector<8x512xf32>
    %c8_49 = arith.constant 8 : index
    %c0_50 = arith.constant 0 : index
    %79 = vector.load %arg7[%c8_49, %c0_50] : memref<9x512xf32, #tpu.memory_space<vmem>>, vector<1x512xf32>
    %80 = vector.broadcast %79 : vector<1x512xf32> to vector<8x512xf32>
    %81 = arith.mulf %78, %80 : vector<8x512xf32>
    %82 = tpu.concatenate %53, %57, %61, %65, %49, %69, %73, %77, %81 in 0 : vector<8x512xf32>, vector<8x512xf32>, vector<8x512xf32>, vector<8x512xf32>, vector<8x512xf32>, vector<8x512xf32>, vector<8x512xf32>, vector<8x512xf32>, vector<8x512xf32> -> vector<72x512xf32>
    %83 = arith.truncf %82 : vector<72x512xf32> to vector<72x512xbf16>
    %c0_51 = arith.constant 0 : index
    %c0_52 = arith.constant 0 : index
    %84 = vector.load %arg3[%c0_51, %c0_52] : memref<8x72xbf16, #tpu.memory_space<vmem>>, vector<8x72xbf16>
    %cst_53 = arith.constant dense<0.000000e+00> : vector<8x512xf32>
    %85 = tpu.matmul %84, %83, %cst_53 {dimension_numbers = #tpu.dot_dimension_numbers<[1], [0], [0], [1], [0, 0, 1, 1], [], []>} : vector<8x72xbf16>, vector<72x512xbf16>, vector<8x512xf32> -> vector<8x512xf32>
    %c0_54 = arith.constant 0 : index
    %c0_55 = arith.constant 0 : index
    %86 = vector.load %arg4[%c0_54, %c0_55] : memref<8x1xf32, #tpu.memory_space<vmem>>, vector<8x1xf32>
    %87 = vector.broadcast %86 : vector<8x1xf32> to vector<8x512xf32>
    %88 = arith.addf %85, %87 : vector<8x512xf32>
    %cst_56 = arith.constant 0.000000e+00 : f32
    %89 = vector.broadcast %cst_56 : f32 to vector<8x512xf32>
    %90 = arith.maximumf %88, %89 : vector<8x512xf32>
    %c511_i32_57 = arith.constant 511 : i32
    %91 = tpu.dynamic_rotate %90 by %c511_i32_57 dim 1 : vector<8x512xf32>, i32 -> vector<8x512xf32>
    %92 = arith.maximumf %90, %91 : vector<8x512xf32>
    %c496_i32_58 = arith.constant 496 : i32
    %93 = tpu.dynamic_rotate %92 by %c496_i32_58 dim 1 : vector<8x512xf32>, i32 -> vector<8x512xf32>
    %94 = arith.maximumf %92, %93 : vector<8x512xf32>
    %95 = arith.truncf %94 : vector<8x512xf32> to vector<8x512xbf16>
    %c0_59 = arith.constant 0 : index
    %c0_60 = arith.constant 0 : index
    %96 = vector.load %arg9[%c0_59, %c0_60] : memref<512x128xbf16, #tpu.memory_space<vmem>>, vector<512x128xbf16>
    %cst_61 = arith.constant dense<0.000000e+00> : vector<8x128xf32>
    %97 = tpu.matmul %95, %96, %cst_61 {dimension_numbers = #tpu.dot_dimension_numbers<[1], [0], [0], [1], [0, 0, 1, 1], [], []>} : vector<8x512xbf16>, vector<512x128xbf16>, vector<8x128xf32> -> vector<8x128xf32>
    %c9_i32 = arith.constant 9 : i32
    %98 = tpu.dynamic_rotate %97 by %c9_i32 dim 1 : vector<8x128xf32>, i32 -> vector<8x128xf32>
    %c0_62 = arith.constant 0 : index
    %c0_63 = arith.constant 0 : index
    %99 = vector.load %arg8[%c0_62, %c0_63] : memref<9x128xf32, #tpu.memory_space<vmem>>, vector<1x128xf32>
    %100 = vector.broadcast %99 : vector<1x128xf32> to vector<8x128xf32>
    %101 = arith.mulf %98, %100 : vector<8x128xf32>
    %c8_i32 = arith.constant 8 : i32
    %102 = tpu.dynamic_rotate %97 by %c8_i32 dim 1 : vector<8x128xf32>, i32 -> vector<8x128xf32>
    %c1_64 = arith.constant 1 : index
    %c0_65 = arith.constant 0 : index
    %103 = vector.load %arg8[%c1_64, %c0_65] : memref<9x128xf32, #tpu.memory_space<vmem>>, vector<1x128xf32>
    %104 = vector.broadcast %103 : vector<1x128xf32> to vector<8x128xf32>
    %105 = arith.mulf %102, %104 : vector<8x128xf32>
    %c7_i32 = arith.constant 7 : i32
    %106 = tpu.dynamic_rotate %97 by %c7_i32 dim 1 : vector<8x128xf32>, i32 -> vector<8x128xf32>
    %c2_66 = arith.constant 2 : index
    %c0_67 = arith.constant 0 : index
    %107 = vector.load %arg8[%c2_66, %c0_67] : memref<9x128xf32, #tpu.memory_space<vmem>>, vector<1x128xf32>
    %108 = vector.broadcast %107 : vector<1x128xf32> to vector<8x128xf32>
    %109 = arith.mulf %106, %108 : vector<8x128xf32>
    %c1_i32_68 = arith.constant 1 : i32
    %110 = tpu.dynamic_rotate %97 by %c1_i32_68 dim 1 : vector<8x128xf32>, i32 -> vector<8x128xf32>
    %c3_69 = arith.constant 3 : index
    %c0_70 = arith.constant 0 : index
    %111 = vector.load %arg8[%c3_69, %c0_70] : memref<9x128xf32, #tpu.memory_space<vmem>>, vector<1x128xf32>
    %112 = vector.broadcast %111 : vector<1x128xf32> to vector<8x128xf32>
    %113 = arith.mulf %110, %112 : vector<8x128xf32>
    %c127_i32 = arith.constant 127 : i32
    %114 = tpu.dynamic_rotate %97 by %c127_i32 dim 1 : vector<8x128xf32>, i32 -> vector<8x128xf32>
    %c5_71 = arith.constant 5 : index
    %c0_72 = arith.constant 0 : index
    %115 = vector.load %arg8[%c5_71, %c0_72] : memref<9x128xf32, #tpu.memory_space<vmem>>, vector<1x128xf32>
    %116 = vector.broadcast %115 : vector<1x128xf32> to vector<8x128xf32>
    %117 = arith.mulf %114, %116 : vector<8x128xf32>
    %c121_i32 = arith.constant 121 : i32
    %118 = tpu.dynamic_rotate %97 by %c121_i32 dim 1 : vector<8x128xf32>, i32 -> vector<8x128xf32>
    %c6_73 = arith.constant 6 : index
    %c0_74 = arith.constant 0 : index
    %119 = vector.load %arg8[%c6_73, %c0_74] : memref<9x128xf32, #tpu.memory_space<vmem>>, vector<1x128xf32>
    %120 = vector.broadcast %119 : vector<1x128xf32> to vector<8x128xf32>
    %121 = arith.mulf %118, %120 : vector<8x128xf32>
    %c120_i32 = arith.constant 120 : i32
    %122 = tpu.dynamic_rotate %97 by %c120_i32 dim 1 : vector<8x128xf32>, i32 -> vector<8x128xf32>
    %c7_75 = arith.constant 7 : index
    %c0_76 = arith.constant 0 : index
    %123 = vector.load %arg8[%c7_75, %c0_76] : memref<9x128xf32, #tpu.memory_space<vmem>>, vector<1x128xf32>
    %124 = vector.broadcast %123 : vector<1x128xf32> to vector<8x128xf32>
    %125 = arith.mulf %122, %124 : vector<8x128xf32>
    %c119_i32 = arith.constant 119 : i32
    %126 = tpu.dynamic_rotate %97 by %c119_i32 dim 1 : vector<8x128xf32>, i32 -> vector<8x128xf32>
    %c8_77 = arith.constant 8 : index
    %c0_78 = arith.constant 0 : index
    %127 = vector.load %arg8[%c8_77, %c0_78] : memref<9x128xf32, #tpu.memory_space<vmem>>, vector<1x128xf32>
    %128 = vector.broadcast %127 : vector<1x128xf32> to vector<8x128xf32>
    %129 = arith.mulf %126, %128 : vector<8x128xf32>
    %130 = tpu.concatenate %101, %105, %109, %113, %97, %117, %121, %125, %129 in 0 : vector<8x128xf32>, vector<8x128xf32>, vector<8x128xf32>, vector<8x128xf32>, vector<8x128xf32>, vector<8x128xf32>, vector<8x128xf32>, vector<8x128xf32>, vector<8x128xf32> -> vector<72x128xf32>
    %131 = arith.truncf %130 : vector<72x128xf32> to vector<72x128xbf16>
    %c0_79 = arith.constant 0 : index
    %c0_80 = arith.constant 0 : index
    %132 = vector.load %arg5[%c0_79, %c0_80] : memref<16x72xbf16, #tpu.memory_space<vmem>>, vector<16x72xbf16>
    %cst_81 = arith.constant dense<0.000000e+00> : vector<16x128xf32>
    %133 = tpu.matmul %132, %131, %cst_81 {dimension_numbers = #tpu.dot_dimension_numbers<[1], [0], [0], [1], [0, 0, 1, 1], [], []>} : vector<16x72xbf16>, vector<72x128xbf16>, vector<16x128xf32> -> vector<16x128xf32>
    %c0_82 = arith.constant 0 : index
    %c0_83 = arith.constant 0 : index
    %134 = vector.load %arg6[%c0_82, %c0_83] : memref<16x1xf32, #tpu.memory_space<vmem>>, vector<16x1xf32>
    %135 = vector.broadcast %134 : vector<16x1xf32> to vector<16x128xf32>
    %136 = arith.addf %133, %135 : vector<16x128xf32>
    %cst_84 = arith.constant 0.000000e+00 : f32
    %137 = vector.broadcast %cst_84 : f32 to vector<16x128xf32>
    %138 = arith.maximumf %136, %137 : vector<16x128xf32>
    %c127_i32_85 = arith.constant 127 : i32
    %139 = tpu.dynamic_rotate %138 by %c127_i32_85 dim 1 : vector<16x128xf32>, i32 -> vector<16x128xf32>
    %140 = arith.maximumf %138, %139 : vector<16x128xf32>
    %c120_i32_86 = arith.constant 120 : i32
    %141 = tpu.dynamic_rotate %140 by %c120_i32_86 dim 1 : vector<16x128xf32>, i32 -> vector<16x128xf32>
    %142 = arith.maximumf %140, %141 : vector<16x128xf32>
    %143 = arith.truncf %142 : vector<16x128xf32> to vector<16x128xbf16>
    %c0_87 = arith.constant 0 : index
    %c0_88 = arith.constant 0 : index
    %144 = vector.load %arg10[%c0_87, %c0_88] : memref<128x8xbf16, #tpu.memory_space<vmem>>, vector<128x8xbf16>
    %cst_89 = arith.constant dense<0.000000e+00> : vector<16x8xf32>
    %145 = tpu.matmul %143, %144, %cst_89 {dimension_numbers = #tpu.dot_dimension_numbers<[1], [0], [0], [1], [0, 0, 1, 1], [], []>} : vector<16x128xbf16>, vector<128x8xbf16>, vector<16x8xf32> -> vector<16x8xf32>
    %146 = vector.extract_strided_slice %145 {offsets = [0, 0], sizes = [16, 2], strides = [1, 1]} : vector<16x8xf32> to vector<16x2xf32>
    %147 = vector.extract_strided_slice %145 {offsets = [0, 2], sizes = [16, 2], strides = [1, 1]} : vector<16x8xf32> to vector<16x2xf32>
    %148 = vector.extract_strided_slice %145 {offsets = [0, 4], sizes = [16, 2], strides = [1, 1]} : vector<16x8xf32> to vector<16x2xf32>
    %149 = vector.extract_strided_slice %145 {offsets = [0, 6], sizes = [16, 2], strides = [1, 1]} : vector<16x8xf32> to vector<16x2xf32>
    %150 = tpu.concatenate %146, %147, %148, %149 in 0 : vector<16x2xf32>, vector<16x2xf32>, vector<16x2xf32>, vector<16x2xf32> -> vector<64x2xf32>
    %c0_90 = arith.constant 0 : index
    %c0_91 = arith.constant 0 : index
    %151 = vector.load %arg11[%c0_90, %c0_91] : memref<32x64xf32, #tpu.memory_space<vmem>>, vector<32x64xf32>
    %cst_92 = arith.constant dense<0.000000e+00> : vector<32x2xf32>
    %152 = tpu.matmul %151, %150, %cst_92 {dimension_numbers = #tpu.dot_dimension_numbers<[1], [0], [0], [1], [0, 0, 1, 1], [], []>} : vector<32x64xf32>, vector<64x2xf32>, vector<32x2xf32> -> vector<32x2xf32>
    %c0_93 = arith.constant 0 : index
    %c0_94 = arith.constant 0 : index
    %153 = vector.load %arg12[%c0_93, %c0_94] : memref<32x1xf32, #tpu.memory_space<vmem>>, vector<32x1xf32>
    %154 = vector.broadcast %153 : vector<32x1xf32> to vector<32x2xf32>
    %155 = arith.addf %152, %154 : vector<32x2xf32>
    %cst_95 = arith.constant dense<0.000000e+00> : vector<32xf32>
    %156 = vector.multi_reduction <add>, %155, %cst_95 [1] : vector<32x2xf32> to vector<32xf32>
    %157 = vector.shape_cast %156 : vector<32xf32> to vector<32x1xf32>
    %cst_96 = arith.constant 2.000000e+00 : f32
    %158 = vector.broadcast %cst_96 : f32 to vector<32x1xf32>
    %159 = arith.divf %157, %158 : vector<32x1xf32>
    %160 = vector.broadcast %159 : vector<32x1xf32> to vector<32x2xf32>
    %161 = arith.subf %155, %160 : vector<32x2xf32>
    %162 = arith.mulf %161, %161 : vector<32x2xf32>
    %cst_97 = arith.constant dense<0.000000e+00> : vector<32xf32>
    %163 = vector.multi_reduction <add>, %162, %cst_97 [1] : vector<32x2xf32> to vector<32xf32>
    %164 = vector.shape_cast %163 : vector<32xf32> to vector<32x1xf32>
    %cst_98 = arith.constant 2.000000e+00 : f32
    %165 = vector.broadcast %cst_98 : f32 to vector<32x1xf32>
    %166 = arith.divf %164, %165 : vector<32x1xf32>
    %167 = vector.broadcast %159 : vector<32x1xf32> to vector<32x2xf32>
    %168 = arith.subf %155, %167 : vector<32x2xf32>
    %cst_99 = arith.constant 9.99999974E-6 : f32
    %169 = vector.broadcast %cst_99 : f32 to vector<32x1xf32>
    %170 = arith.addf %166, %169 : vector<32x1xf32>
    %171 = math.rsqrt %170 : vector<32x1xf32>
    %172 = vector.broadcast %171 : vector<32x1xf32> to vector<32x2xf32>
    %173 = arith.mulf %168, %172 : vector<32x2xf32>
    %c0_100 = arith.constant 0 : index
    %c0_101 = arith.constant 0 : index
    %174 = vector.load %arg13[%c0_100, %c0_101] : memref<32x1xf32, #tpu.memory_space<vmem>>, vector<32x1xf32>
    %175 = vector.broadcast %174 : vector<32x1xf32> to vector<32x2xf32>
    %176 = arith.mulf %173, %175 : vector<32x2xf32>
    %c0_102 = arith.constant 0 : index
    %c0_103 = arith.constant 0 : index
    %177 = vector.load %arg14[%c0_102, %c0_103] : memref<32x1xf32, #tpu.memory_space<vmem>>, vector<32x1xf32>
    %178 = vector.broadcast %177 : vector<32x1xf32> to vector<32x2xf32>
    %179 = arith.addf %176, %178 : vector<32x2xf32>
    %c0_104 = arith.constant 0 : index
    %c0_105 = arith.constant 0 : index
    %180 = vector.load %arg15[%c0_104, %c0_105] : memref<32x2xf32, #tpu.memory_space<vmem>>, vector<32x2xf32>
    tpu.vector_store %arg15[%c0_104, %c0_105], %179 {strides = array<i32>} : memref<32x2xf32, #tpu.memory_space<vmem>>, vector<32x2xf32>,
    return
  }
}

</mosaic_0001>

<llo_original>
// kernel: encoder_cnn_forward.1
$region0: #{encoder_cnn_forward.1}
  #allocation0 [shape = 'u32[]', space=smem, size = 0x4, offset = 0x4, fixed_abs, tag = 'smem constant byte address 0x4 - core index']
  #allocation1 [shape = 'u32[72,128]{1,0:T(1,128)}', space=vmem, size = 0x9000, scoped, tag = 'internal scratch']
  #allocation2 [shape = 'f32[8,512]{1,0:T(8,128)}', space=vmem, size = 0x4000, scoped, tag = 'scratch operand']
  %s0 = inlined_call_operand.vmem [shape: f32[2,3,256], index: 0, kind: input, shape index: {}]
  %s1 = inlined_call_operand.vmem [shape: bf16[8,72], index: 1, kind: input, shape index: {}]
  %s2 = inlined_call_operand.vmem [shape: f32[8,1], index: 2, kind: input, shape index: {}]
  %s3 = inlined_call_operand.vmem [shape: bf16[8,72], index: 3, kind: input, shape index: {}]
  %s4 = inlined_call_operand.vmem [shape: f32[8,1], index: 4, kind: input, shape index: {}]
  %s5 = inlined_call_operand.vmem [shape: bf16[16,72], index: 5, kind: input, shape index: {}]
  %s6 = inlined_call_operand.vmem [shape: f32[16,1], index: 6, kind: input, shape index: {}]
  %s7 = inlined_call_operand.vmem [shape: f32[9,512], index: 7, kind: input, shape index: {}]
  %s8 = inlined_call_operand.vmem [shape: f32[9,128], index: 8, kind: input, shape index: {}]
  %s9 = inlined_call_operand.vmem [shape: bf16[512,128], index: 9, kind: input, shape index: {}]
  %s10 = inlined_call_operand.vmem [shape: bf16[128,8], index: 10, kind: input, shape index: {}]
  %s11 = inlined_call_operand.vmem [shape: f32[32,64], index: 11, kind: input, shape index: {}]
  %s12 = inlined_call_operand.vmem [shape: f32[32,1], index: 12, kind: input, shape index: {}]
  %s13 = inlined_call_operand.vmem [shape: f32[32,1], index: 13, kind: input, shape index: {}]
  %s14 = inlined_call_operand.vmem [shape: f32[32,1], index: 14, kind: input, shape index: {}]
  %s15 = inlined_call_operand.vmem [shape: f32[32,2], index: 15, kind: output, shape index: {}]
  %s16 = sld [smem:[#allocation0]]
  $region70: #{encoder_cnn_forward.1} parent=0
    _
  %s18 = ssub.s32 1, %s16
  %s19 = scalar_select 0, %s18, %s16
  // Predicated region
  $region2: #{encoder_cnn_forward.1} parent=0 // pred_check
    _
  $region3: #{encoder_cnn_forward.1} parent=0 // pred_check_branch
    %21 = sbr.rel (0) target = $region5
  $region4: #{encoder_cnn_forward.1} parent=0 // pred_region
    _
  $region5: #{encoder_cnn_forward.1} parent=0 // pred_fallthru
    _
  // Predicated region
  $region6: #{encoder_cnn_forward.1} parent=0 // pred_check
    _
  $region7: #{encoder_cnn_forward.1} parent=0 // pred_check_branch
    %23 = sbr.rel (0) target = $region9
  $region8: #{encoder_cnn_forward.1} parent=0 // pred_region
    _
  $region9: #{encoder_cnn_forward.1} parent=0 // pred_fallthru
    _
  // Predicated region
  $region10: #{encoder_cnn_forward.1} parent=0 // pred_check
    _
  $region11: #{encoder_cnn_forward.1} parent=0 // pred_check_branch
    %25 = sbr.rel (0) target = $region13
  $region12: #{encoder_cnn_forward.1} parent=0 // pred_region
    _
  $region13: #{encoder_cnn_forward.1} parent=0 // pred_fallthru
    _
  // Predicated region
  $region14: #{encoder_cnn_forward.1} parent=0 // pred_check
    _
  $region15: #{encoder_cnn_forward.1} parent=0 // pred_check_branch
    %27 = sbr.rel (0) target = $region17
  $region16: #{encoder_cnn_forward.1} parent=0 // pred_region
    _
  $region17: #{encoder_cnn_forward.1} parent=0 // pred_fallthru
    _
  // Predicated region
  $region18: #{encoder_cnn_forward.1} parent=0 // pred_check
    _
  $region19: #{encoder_cnn_forward.1} parent=0 // pred_check_branch
    %29 = sbr.rel (0) target = $region21
  $region20: #{encoder_cnn_forward.1} parent=0 // pred_region
    _
  $region21: #{encoder_cnn_forward.1} parent=0 // pred_fallthru
    _
  // Predicated region
  $region22: #{encoder_cnn_forward.1} parent=0 // pred_check
    _
  $region23: #{encoder_cnn_forward.1} parent=0 // pred_check_branch
    %31 = sbr.rel (0) target = $region25
  $region24: #{encoder_cnn_forward.1} parent=0 // pred_region
    _
  $region25: #{encoder_cnn_forward.1} parent=0 // pred_fallthru
    _
  // Predicated region
  $region26: #{encoder_cnn_forward.1} parent=0 // pred_check
    _
  $region27: #{encoder_cnn_forward.1} parent=0 // pred_check_branch
    %33 = sbr.rel (0) target = $region29
  $region28: #{encoder_cnn_forward.1} parent=0 // pred_region
    _
  $region29: #{encoder_cnn_forward.1} parent=0 // pred_fallthru
    _
  // Predicated region
  $region30: #{encoder_cnn_forward.1} parent=0 // pred_check
    _
  $region31: #{encoder_cnn_forward.1} parent=0 // pred_check_branch
    %35 = sbr.rel (0) target = $region33
  $region32: #{encoder_cnn_forward.1} parent=0 // pred_region
    _
  $region33: #{encoder_cnn_forward.1} parent=0 // pred_fallthru
    _
  // Predicated region
  $region34: #{encoder_cnn_forward.1} parent=0 // pred_check
    _
  $region35: #{encoder_cnn_forward.1} parent=0 // pred_check_branch
    %37 = sbr.rel (0) target = $region37
  $region36: #{encoder_cnn_forward.1} parent=0 // pred_region
    _
  $region37: #{encoder_cnn_forward.1} parent=0 // pred_fallthru
    _
  // Predicated region
  $region38: #{encoder_cnn_forward.1} parent=0 // pred_check
    _
  $region39: #{encoder_cnn_forward.1} parent=0 // pred_check_branch
    %39 = sbr.rel (0) target = $region41
  $region40: #{encoder_cnn_forward.1} parent=0 // pred_region
    _
  $region41: #{encoder_cnn_forward.1} parent=0 // pred_fallthru
    _
  // Predicated region
  $region42: #{encoder_cnn_forward.1} parent=0 // pred_check
    _
  $region43: #{encoder_cnn_forward.1} parent=0 // pred_check_branch
    %41 = sbr.rel (0) target = $region45
  $region44: #{encoder_cnn_forward.1} parent=0 // pred_region
    _
  $region45: #{encoder_cnn_forward.1} parent=0 // pred_fallthru
    _
  // Predicated region
  $region46: #{encoder_cnn_forward.1} parent=0 // pred_check
    _
  $region47: #{encoder_cnn_forward.1} parent=0 // pred_check_branch
    %43 = sbr.rel (0) target = $region49
  $region48: #{encoder_cnn_forward.1} parent=0 // pred_region
    _
  $region49: #{encoder_cnn_forward.1} parent=0 // pred_fallthru
    _
  // Predicated region
  $region50: #{encoder_cnn_forward.1} parent=0 // pred_check
    _
  $region51: #{encoder_cnn_forward.1} parent=0 // pred_check_branch
    %45 = sbr.rel (0) target = $region53
  $region52: #{encoder_cnn_forward.1} parent=0 // pred_region
    _
  $region53: #{encoder_cnn_forward.1} parent=0 // pred_fallthru
    _
  // Predicated region
  $region54: #{encoder_cnn_forward.1} parent=0 // pred_check
    _
  $region55: #{encoder_cnn_forward.1} parent=0 // pred_check_branch
    %47 = sbr.rel (0) target = $region57
  $region56: #{encoder_cnn_forward.1} parent=0 // pred_region
    _
  $region57: #{encoder_cnn_forward.1} parent=0 // pred_fallthru
    _
  // Predicated region
  $region58: #{encoder_cnn_forward.1} parent=0 // pred_check
    _
  $region59: #{encoder_cnn_forward.1} parent=0 // pred_check_branch
    %49 = sbr.rel (0) target = $region61
  $region60: #{encoder_cnn_forward.1} parent=0 // pred_region
    _
  $region61: #{encoder_cnn_forward.1} parent=0 // pred_fallthru
    _
  %51 = vst [vmem:[#allocation2] sm:$0xf8] 0.0
  %52 = vst [vmem:[#allocation2 + $0x8] sm:$0xf8] 0.0
  %53 = vst [vmem:[#allocation2 + $0x10] sm:$0xf8] 0.0
  %54 = vst [vmem:[#allocation2 + $0x18] sm:$0xf8] 0.0
  %v55 = vld [vmem:[%s0] sm:$0x77]
  %57 = vst [vmem:[#allocation1] ss:$2 sm:$0xff] %v55
  %v58 = vld.sshfl [vmem:[#allocation1] sm:$0xff pattern:$0x75316420]
  %v59 = vld.sshfl [vmem:[#allocation1 + $0x8] sm:$0xff pattern:$0x75316420]
  %62 = vst [vmem:[#allocation2] sm:$0x7] %v58
  %63 = vst [vmem:[#allocation2 + $0x8] sm:$0x7] %v59
  %s64 = scalar_lea.vmem %s0, 8
  %v65 = vld [vmem:[%s64] sm:$0x77]
  %67 = vst [vmem:[#allocation1] ss:$2 sm:$0xff] %v65
  %v68 = vld.sshfl [vmem:[#allocation1] sm:$0xff pattern:$0x75316420]
  %v69 = vld.sshfl [vmem:[#allocation1 + $0x8] sm:$0xff pattern:$0x75316420]
  %72 = vst [vmem:[#allocation2 + $0x10] sm:$0x7] %v68
  %73 = vst [vmem:[#allocation2 + $0x18] sm:$0x7] %v69
  %v74 = vld [vmem:[#allocation2] sm:$0xff]
  %v75 = vld [vmem:[#allocation2 + $0x8] sm:$0xff]
  %v76 = vld [vmem:[#allocation2 + $0x10] sm:$0xff]
  %v77 = vld [vmem:[#allocation2 + $0x18] sm:$0xff]
  %78 = vrot.lane.b32.xlu0 %v74, 17
  %v79 = vpop.permute.xlu0 %78
  %80 = vrot.lane.b32.xlu0 %v75, 17
  %v81 = vpop.permute.xlu0 %80
  %82 = vrot.lane.b32.xlu0 %v76, 17
  %v83 = vpop.permute.xlu0 %82
  %84 = vrot.lane.b32.xlu0 %v77, 17
  %v85 = vpop.permute.xlu0 %84
  %v86 = vlaneseq
  %v87 = vand.u32 %v86, 127
  %vm88 = vcmp.lt.s32.totalorder %v87, 17
  %v89 = vsel %vm88, %v83, %v85
  %v90 = vsel %vm88, %v81, %v83
  %v91 = vsel %vm88, %v79, %v81
  %v92 = vsel %vm88, %v85, %v79
  %v93 = vld [vmem:[%s7] ss:$8 sm:$0xf]
  %v95 = vperm.slane %v93, 0
  %v96 = vperm.slane %v93, 1
  %v97 = vperm.slane %v93, 2
  %v98 = vperm.slane %v93, 3
  %v103 = vmul.f32 %v92, %v95
  %v104 = vmul.f32 %v91, %v96
  %v105 = vmul.f32 %v90, %v97
  %v106 = vmul.f32 %v89, %v98
  %107 = vrot.lane.b32.xlu0 %v74, 16
  %v108 = vpop.permute.xlu0 %107
  %109 = vrot.lane.b32.xlu0 %v75, 16
  %v110 = vpop.permute.xlu0 %109
  %111 = vrot.lane.b32.xlu0 %v76, 16
  %v112 = vpop.permute.xlu0 %111
  %113 = vrot.lane.b32.xlu0 %v77, 16
  %v114 = vpop.permute.xlu0 %113
  %vm115 = vcmp.lt.s32.totalorder %v87, 16
  %v116 = vsel %vm115, %v112, %v114
  %v117 = vsel %vm115, %v110, %v112
  %v118 = vsel %vm115, %v108, %v110
  %v119 = vsel %vm115, %v114, %v108
  %s120 = scalar_lea.vmem %s7, 1
  %v121 = vld [vmem:[%s120] ss:$8 sm:$0xf]
  %v123 = vperm.slane %v121, 0
  %v124 = vperm.slane %v121, 1
  %v125 = vperm.slane %v121, 2
  %v126 = vperm.slane %v121, 3
  %v131 = vmul.f32 %v119, %v123
  %v132 = vmul.f32 %v118, %v124
  %v133 = vmul.f32 %v117, %v125
  %v134 = vmul.f32 %v116, %v126
  %135 = vrot.lane.b32.xlu0 %v74, 15
  %v136 = vpop.permute.xlu0 %135
  %137 = vrot.lane.b32.xlu0 %v75, 15
  %v138 = vpop.permute.xlu0 %137
  %139 = vrot.lane.b32.xlu0 %v76, 15
  %v140 = vpop.permute.xlu0 %139
  %141 = vrot.lane.b32.xlu0 %v77, 15
  %v142 = vpop.permute.xlu0 %141
  %vm143 = vcmp.lt.s32.totalorder %v87, 15
  %v144 = vsel %vm143, %v140, %v142
  %v145 = vsel %vm143, %v138, %v140
  %v146 = vsel %vm143, %v136, %v138
  %v147 = vsel %vm143, %v142, %v136
  %s148 = scalar_lea.vmem %s7, 2
  %v149 = vld [vmem:[%s148] ss:$8 sm:$0xf]
  %v151 = vperm.slane %v149, 0
  %v152 = vperm.slane %v149, 1
  %v153 = vperm.slane %v149, 2
  %v154 = vperm.slane %v149, 3
  %v159 = vmul.f32 %v147, %v151
  %v160 = vmul.f32 %v146, %v152
  %v161 = vmul.f32 %v145, %v153
  %v162 = vmul.f32 %v144, %v154
  %163 = vrot.lane.b32.xlu0 %v74, 1
  %v164 = vpop.permute.xlu0 %163
  %165 = vrot.lane.b32.xlu0 %v75, 1
  %v166 = vpop.permute.xlu0 %165
  %167 = vrot.lane.b32.xlu0 %v76, 1
  %v168 = vpop.permute.xlu0 %167
  %169 = vrot.lane.b32.xlu0 %v77, 1
  %v170 = vpop.permute.xlu0 %169
  %vm171 = vcmp.lt.s32.totalorder %v87, 1
  %v172 = vsel %vm171, %v168, %v170
  %v173 = vsel %vm171, %v166, %v168
  %v174 = vsel %vm171, %v164, %v166
  %v175 = vsel %vm171, %v170, %v164
  %s176 = scalar_lea.vmem %s7, 3
  %v177 = vld [vmem:[%s176] ss:$8 sm:$0xf]
  %v179 = vperm.slane %v177, 0
  %v180 = vperm.slane %v177, 1
  %v181 = vperm.slane %v177, 2
  %v182 = vperm.slane %v177, 3
  %v187 = vmul.f32 %v175, %v179
  %v188 = vmul.f32 %v174, %v180
  %v189 = vmul.f32 %v173, %v181
  %v190 = vmul.f32 %v172, %v182
  %191 = vrot.lane.b32.xlu0 %v74, 127
  %v192 = vpop.permute.xlu0 %191
  %193 = vrot.lane.b32.xlu0 %v75, 127
  %v194 = vpop.permute.xlu0 %193
  %195 = vrot.lane.b32.xlu0 %v76, 127
  %v196 = vpop.permute.xlu0 %195
  %197 = vrot.lane.b32.xlu0 %v77, 127
  %v198 = vpop.permute.xlu0 %197
  %vm199 = vcmp.lt.s32.totalorder %v87, 127
  %v200 = vsel %vm199, %v196, %v198
  %v201 = vsel %vm199, %v194, %v196
  %v202 = vsel %vm199, %v192, %v194
  %v203 = vsel %vm199, %v198, %v192
  %s204 = scalar_lea.vmem %s7, 5
  %v205 = vld [vmem:[%s204] ss:$8 sm:$0xf]
  %v207 = vperm.slane %v205, 0
  %v208 = vperm.slane %v205, 1
  %v209 = vperm.slane %v205, 2
  %v210 = vperm.slane %v205, 3
  %v215 = vmul.f32 %v202, %v207
  %v216 = vmul.f32 %v201, %v208
  %v217 = vmul.f32 %v200, %v209
  %v218 = vmul.f32 %v203, %v210
  %219 = vrot.lane.b32.xlu0 %v74, 113
  %v220 = vpop.permute.xlu0 %219
  %221 = vrot.lane.b32.xlu0 %v75, 113
  %v222 = vpop.permute.xlu0 %221
  %223 = vrot.lane.b32.xlu0 %v76, 113
  %v224 = vpop.permute.xlu0 %223
  %225 = vrot.lane.b32.xlu0 %v77, 113
  %v226 = vpop.permute.xlu0 %225
  %vm227 = vcmp.lt.s32.totalorder %v87, 113
  %v228 = vsel %vm227, %v224, %v226
  %v229 = vsel %vm227, %v222, %v224
  %v230 = vsel %vm227, %v220, %v222
  %v231 = vsel %vm227, %v226, %v220
  %s232 = scalar_lea.vmem %s7, 6
  %v233 = vld [vmem:[%s232] ss:$8 sm:$0xf]
  %v235 = vperm.slane %v233, 0
  %v236 = vperm.slane %v233, 1
  %v237 = vperm.slane %v233, 2
  %v238 = vperm.slane %v233, 3
  %v243 = vmul.f32 %v230, %v235
  %v244 = vmul.f32 %v229, %v236
  %v245 = vmul.f32 %v228, %v237
  %v246 = vmul.f32 %v231, %v238
  %247 = vrot.lane.b32.xlu0 %v74, 112
  %v248 = vpop.permute.xlu0 %247
  %249 = vrot.lane.b32.xlu0 %v75, 112
  %v250 = vpop.permute.xlu0 %249
  %251 = vrot.lane.b32.xlu0 %v76, 112
  %v252 = vpop.permute.xlu0 %251
  %253 = vrot.lane.b32.xlu0 %v77, 112
  %v254 = vpop.permute.xlu0 %253
  %vm255 = vcmp.lt.s32.totalorder %v87, 112
  %v256 = vsel %vm255, %v252, %v254
  %v257 = vsel %vm255, %v250, %v252
  %v258 = vsel %vm255, %v248, %v250
  %v259 = vsel %vm255, %v254, %v248
  %s260 = scalar_lea.vmem %s7, 7
  %v261 = vld [vmem:[%s260] ss:$8 sm:$0xf]
  %v263 = vperm.slane %v261, 0
  %v264 = vperm.slane %v261, 1
  %v265 = vperm.slane %v261, 2
  %v266 = vperm.slane %v261, 3
  %v271 = vmul.f32 %v258, %v263
  %v272 = vmul.f32 %v257, %v264
  %v273 = vmul.f32 %v256, %v265
  %v274 = vmul.f32 %v259, %v266
  %275 = vrot.lane.b32.xlu0 %v74, 111
  %v276 = vpop.permute.xlu0 %275
  %277 = vrot.lane.b32.xlu0 %v75, 111
  %v278 = vpop.permute.xlu0 %277
  %279 = vrot.lane.b32.xlu0 %v76, 111
  %v280 = vpop.permute.xlu0 %279
  %281 = vrot.lane.b32.xlu0 %v77, 111
  %v282 = vpop.permute.xlu0 %281
  %vm283 = vcmp.lt.s32.totalorder %v87, 111
  %v284 = vsel %vm283, %v280, %v282
  %v285 = vsel %vm283, %v278, %v280
  %v286 = vsel %vm283, %v276, %v278
  %v287 = vsel %vm283, %v282, %v276
  %s288 = scalar_lea.vmem %s7, 32
  %v289 = vld [vmem:[%s288] ss:$8 sm:$0xf]
  %v291 = vperm.slane %v289, 0
  %v292 = vperm.slane %v289, 1
  %v293 = vperm.slane %v289, 2
  %v294 = vperm.slane %v289, 3
  %v299 = vmul.f32 %v286, %v291
  %v300 = vmul.f32 %v285, %v292
  %v301 = vmul.f32 %v284, %v293
  %v302 = vmul.f32 %v287, %v294
  %v303 = vpack.c.bf16 %v131, %v103
  %v304 = vpack.c.bf16 %v132, %v104
  %v305 = vpack.c.bf16 %v133, %v105
  %v306 = vpack.c.bf16 %v134, %v106
  %v307 = vpack.c.bf16 %v187, %v159
  %v308 = vpack.c.bf16 %v188, %v160
  %v309 = vpack.c.bf16 %v189, %v161
  %v310 = vpack.c.bf16 %v190, %v162
  %v311 = vpack.c.bf16 %v215, %v74
  %v312 = vpack.c.bf16 %v216, %v75
  %v313 = vpack.c.bf16 %v217, %v76
  %v314 = vpack.c.bf16 %v218, %v77
  %v315 = vpack.c.bf16 %v271, %v243
  %v316 = vpack.c.bf16 %v272, %v244
  %v317 = vpack.c.bf16 %v273, %v245
  %v318 = vpack.c.bf16 %v274, %v246
  %v319 = vpack.c.bf16 %v299, %v299
  %v320 = vpack.c.bf16 %v300, %v300
  %v321 = vpack.c.bf16 %v301, %v301
  %v322 = vpack.c.bf16 %v302, %v302
  %v323 = vld [vmem:[%s1] sm:$0xf]
  %v324 = vld [vmem:[%s2] sm:$0xff]
  %326 = vset.pattern.permute.xlu0 0
  %327 = vperm.xlu0 %326, %v324
  %v328 = vpop.permute.xlu0 %327
  %vm330 = vcmask 588800
  %v332 = vsel %vm330, %v323, 0
  %vm334 = vcmask 1043456
  %v336 = vsel %vm334, %v319, 0
  %v339 = vsel %vm334, %v320, 0
  %v342 = vsel %vm334, %v321, 0
  %v345 = vsel %vm334, %v322, 0
  %347 = vmatpush.bf16.msra.mxu0 0
  %348 = vmatpush.bf16.msra.mxu0 0
  %349 = vmatpush.bf16.msra.mxu0 0
  %350 = vmatpush.bf16.msra.mxu0 %v336
  %351 = vmatpush.bf16.msra.mxu0 %v315
  %352 = vmatpush.bf16.msra.mxu0 %v311
  %353 = vmatpush.bf16.msra.mxu0 %v307
  %354 = vmatpush.bf16.msra.mxu0 %v303
  %355 = vmatmul.bf16.gmra.mxu0 %v332
  %v356 = vpop.f32.mrf.mxu0
  %v357 = vadd.f32 %v328, %v356
  %v358 = vpop.f32.mrf.mxu0
  %359 = vdwg.mxu0
  %360 = vmatpush.bf16.msra.mxu0 0
  %361 = vmatpush.bf16.msra.mxu0 0
  %362 = vmatpush.bf16.msra.mxu0 0
  %363 = vmatpush.bf16.msra.mxu0 %v339
  %364 = vmatpush.bf16.msra.mxu0 %v316
  %365 = vmatpush.bf16.msra.mxu0 %v312
  %366 = vmatpush.bf16.msra.mxu0 %v308
  %367 = vmatpush.bf16.msra.mxu0 %v304
  %368 = vmatmul.bf16.gmra.mxu0 %v332
  %v369 = vpop.f32.mrf.mxu0
  %v370 = vadd.f32 %v328, %v369
  %v371 = vpop.f32.mrf.mxu0
  %372 = vdwg.mxu0
  %373 = vmatpush.bf16.msra.mxu0 0
  %374 = vmatpush.bf16.msra.mxu0 0
  %375 = vmatpush.bf16.msra.mxu0 0
  %376 = vmatpush.bf16.msra.mxu0 %v342
  %377 = vmatpush.bf16.msra.mxu0 %v317
  %378 = vmatpush.bf16.msra.mxu0 %v313
  %379 = vmatpush.bf16.msra.mxu0 %v309
  %380 = vmatpush.bf16.msra.mxu0 %v305
  %381 = vmatmul.bf16.gmra.mxu0 %v332
  %v382 = vpop.f32.mrf.mxu0
  %v383 = vadd.f32 %v328, %v382
  %v384 = vpop.f32.mrf.mxu0
  %385 = vdwg.mxu0
  %386 = vmatpush.bf16.msra.mxu0 0
  %387 = vmatpush.bf16.msra.mxu0 0
  %388 = vmatpush.bf16.msra.mxu0 0
  %389 = vmatpush.bf16.msra.mxu0 %v345
  %390 = vmatpush.bf16.msra.mxu0 %v318
  %391 = vmatpush.bf16.msra.mxu0 %v314
  %392 = vmatpush.bf16.msra.mxu0 %v310
  %393 = vmatpush.bf16.msra.mxu0 %v306
  %394 = vmatmul.bf16.gmra.mxu0 %v332
  %v395 = vpop.f32.mrf.mxu0
  %v396 = vadd.f32 %v328, %v395
  %v397 = vpop.f32.mrf.mxu0
  %398 = vdwg.mxu0
  %v399 = vmax.f32 %v357, 0.0
  %v400 = vmax.f32 %v370, 0.0
  %v401 = vmax.f32 %v383, 0.0
  %v402 = vmax.f32 %v396, 0.0
  %403 = vrot.lane.b32.xlu0 %v399, 17
  %v404 = vpop.permute.xlu0 %403
  %405 = vrot.lane.b32.xlu0 %v400, 17
  %v406 = vpop.permute.xlu0 %405
  %407 = vrot.lane.b32.xlu0 %v401, 17
  %v408 = vpop.permute.xlu0 %407
  %409 = vrot.lane.b32.xlu0 %v402, 17
  %v410 = vpop.permute.xlu0 %409
  %v411 = vsel %vm88, %v408, %v410
  %v412 = vsel %vm88, %v406, %v408
  %v413 = vsel %vm88, %v404, %v406
  %v414 = vsel %vm88, %v410, %v404
  %v415 = vmul.f32 %v414, %v95
  %v416 = vmul.f32 %v413, %v96
  %v417 = vmul.f32 %v412, %v97
  %v418 = vmul.f32 %v411, %v98
  %419 = vrot.lane.b32.xlu0 %v399, 16
  %v420 = vpop.permute.xlu0 %419
  %421 = vrot.lane.b32.xlu0 %v400, 16
  %v422 = vpop.permute.xlu0 %421
  %423 = vrot.lane.b32.xlu0 %v401, 16
  %v424 = vpop.permute.xlu0 %423
  %425 = vrot.lane.b32.xlu0 %v402, 16
  %v426 = vpop.permute.xlu0 %425
  %v427 = vsel %vm115, %v424, %v426
  %v428 = vsel %vm115, %v422, %v424
  %v429 = vsel %vm115, %v420, %v422
  %v430 = vsel %vm115, %v426, %v420
  %v431 = vmul.f32 %v430, %v123
  %v432 = vmul.f32 %v429, %v124
  %v433 = vmul.f32 %v428, %v125
  %v434 = vmul.f32 %v427, %v126
  %435 = vrot.lane.b32.xlu0 %v399, 15
  %v436 = vpop.permute.xlu0 %435
  %437 = vrot.lane.b32.xlu0 %v400, 15
  %v438 = vpop.permute.xlu0 %437
  %439 = vrot.lane.b32.xlu0 %v401, 15
  %v440 = vpop.permute.xlu0 %439
  %441 = vrot.lane.b32.xlu0 %v402, 15
  %v442 = vpop.permute.xlu0 %441
  %v443 = vsel %vm143, %v440, %v442
  %v444 = vsel %vm143, %v438, %v440
  %v445 = vsel %vm143, %v436, %v438
  %v446 = vsel %vm143, %v442, %v436
  %v447 = vmul.f32 %v446, %v151
  %v448 = vmul.f32 %v445, %v152
  %v449 = vmul.f32 %v444, %v153
  %v450 = vmul.f32 %v443, %v154
  %451 = vrot.lane.b32.xlu0 %v399, 1
  %v452 = vpop.permute.xlu0 %451
  %453 = vrot.lane.b32.xlu0 %v400, 1
  %v454 = vpop.permute.xlu0 %453
  %455 = vrot.lane.b32.xlu0 %v401, 1
  %v456 = vpop.permute.xlu0 %455
  %457 = vrot.lane.b32.xlu0 %v402, 1
  %v458 = vpop.permute.xlu0 %457
  %v459 = vsel %vm171, %v456, %v458
  %v460 = vsel %vm171, %v454, %v456
  %v461 = vsel %vm171, %v452, %v454
  %v462 = vsel %vm171, %v458, %v452
  %v463 = vmul.f32 %v462, %v179
  %v464 = vmul.f32 %v461, %v180
  %v465 = vmul.f32 %v460, %v181
  %v466 = vmul.f32 %v459, %v182
  %467 = vrot.lane.b32.xlu0 %v399, 127
  %v468 = vpop.permute.xlu0 %467
  %469 = vrot.lane.b32.xlu0 %v400, 127
  %v470 = vpop.permute.xlu0 %469
  %471 = vrot.lane.b32.xlu0 %v401, 127
  %v472 = vpop.permute.xlu0 %471
  %473 = vrot.lane.b32.xlu0 %v402, 127
  %v474 = vpop.permute.xlu0 %473
  %v475 = vsel %vm199, %v472, %v474
  %v476 = vsel %vm199, %v470, %v472
  %v477 = vsel %vm199, %v468, %v470
  %v478 = vsel %vm199, %v474, %v468
  %v479 = vmul.f32 %v477, %v207
  %v480 = vmul.f32 %v476, %v208
  %v481 = vmul.f32 %v475, %v209
  %v482 = vmul.f32 %v478, %v210
  %483 = vrot.lane.b32.xlu0 %v399, 113
  %v484 = vpop.permute.xlu0 %483
  %485 = vrot.lane.b32.xlu0 %v400, 113
  %v486 = vpop.permute.xlu0 %485
  %487 = vrot.lane.b32.xlu0 %v401, 113
  %v488 = vpop.permute.xlu0 %487
  %489 = vrot.lane.b32.xlu0 %v402, 113
  %v490 = vpop.permute.xlu0 %489
  %v491 = vsel %vm227, %v488, %v490
  %v492 = vsel %vm227, %v486, %v488
  %v493 = vsel %vm227, %v484, %v486
  %v494 = vsel %vm227, %v490, %v484
  %v495 = vmul.f32 %v493, %v235
  %v496 = vmul.f32 %v492, %v236
  %v497 = vmul.f32 %v491, %v237
  %v498 = vmul.f32 %v494, %v238
  %499 = vrot.lane.b32.xlu0 %v399, 112
  %v500 = vpop.permute.xlu0 %499
  %501 = vrot.lane.b32.xlu0 %v400, 112
  %v502 = vpop.permute.xlu0 %501
  %503 = vrot.lane.b32.xlu0 %v401, 112
  %v504 = vpop.permute.xlu0 %503
  %505 = vrot.lane.b32.xlu0 %v402, 112
  %v506 = vpop.permute.xlu0 %505
  %v507 = vsel %vm255, %v504, %v506
  %v508 = vsel %vm255, %v502, %v504
  %v509 = vsel %vm255, %v500, %v502
  %v510 = vsel %vm255, %v506, %v500
  %v511 = vmul.f32 %v509, %v263
  %v512 = vmul.f32 %v508, %v264
  %v513 = vmul.f32 %v507, %v265
  %v514 = vmul.f32 %v510, %v266
  %515 = vrot.lane.b32.xlu0 %v399, 111
  %v516 = vpop.permute.xlu0 %515
  %517 = vrot.lane.b32.xlu0 %v400, 111
  %v518 = vpop.permute.xlu0 %517
  %519 = vrot.lane.b32.xlu0 %v401, 111
  %v520 = vpop.permute.xlu0 %519
  %521 = vrot.lane.b32.xlu0 %v402, 111
  %v522 = vpop.permute.xlu0 %521
  %v523 = vsel %vm283, %v520, %v522
  %v524 = vsel %vm283, %v518, %v520
  %v525 = vsel %vm283, %v516, %v518
  %v526 = vsel %vm283, %v522, %v516
  %v527 = vmul.f32 %v525, %v291
  %v528 = vmul.f32 %v524, %v292
  %v529 = vmul.f32 %v523, %v293
  %v530 = vmul.f32 %v526, %v294
  %v531 = vpack.c.bf16 %v431, %v415
  %v532 = vpack.c.bf16 %v432, %v416
  %v533 = vpack.c.bf16 %v433, %v417
  %v534 = vpack.c.bf16 %v434, %v418
  %v535 = vpack.c.bf16 %v463, %v447
  %v536 = vpack.c.bf16 %v464, %v448
  %v537 = vpack.c.bf16 %v465, %v449
  %v538 = vpack.c.bf16 %v466, %v450
  %v539 = vpack.c.bf16 %v479, %v399
  %v540 = vpack.c.bf16 %v480, %v400
  %v541 = vpack.c.bf16 %v481, %v401
  %v542 = vpack.c.bf16 %v482, %v402
  %v543 = vpack.c.bf16 %v511, %v495
  %v544 = vpack.c.bf16 %v512, %v496
  %v545 = vpack.c.bf16 %v513, %v497
  %v546 = vpack.c.bf16 %v514, %v498
  %v547 = vpack.c.bf16 %v527, %v527
  %v548 = vpack.c.bf16 %v528, %v528
  %v549 = vpack.c.bf16 %v529, %v529
  %v550 = vpack.c.bf16 %v530, %v530
  %v551 = vld [vmem:[%s3] sm:$0xf]
  %v552 = vld [vmem:[%s4] sm:$0xff]
  %554 = vset.pattern.permute.xlu0 0
  %555 = vperm.xlu0 %554, %v552
  %v556 = vpop.permute.xlu0 %555
  %v559 = vsel %vm330, %v551, 0
  %v562 = vsel %vm334, %v547, 0
  %v565 = vsel %vm334, %v548, 0
  %v568 = vsel %vm334, %v549, 0
  %v571 = vsel %vm334, %v550, 0
  %573 = vmatpush.bf16.msra.mxu0 0
  %574 = vmatpush.bf16.msra.mxu0 0
  %575 = vmatpush.bf16.msra.mxu0 0
  %576 = vmatpush.bf16.msra.mxu0 %v562
  %577 = vmatpush.bf16.msra.mxu0 %v543
  %578 = vmatpush.bf16.msra.mxu0 %v539
  %579 = vmatpush.bf16.msra.mxu0 %v535
  %580 = vmatpush.bf16.msra.mxu0 %v531
  %581 = vmatmul.bf16.gmra.mxu0 %v559
  %v582 = vpop.f32.mrf.mxu0
  %v583 = vadd.f32 %v556, %v582
  %v584 = vpop.f32.mrf.mxu0
  %585 = vdwg.mxu0
  %586 = vmatpush.bf16.msra.mxu0 0
  %587 = vmatpush.bf16.msra.mxu0 0
  %588 = vmatpush.bf16.msra.mxu0 0
  %589 = vmatpush.bf16.msra.mxu0 %v565
  %590 = vmatpush.bf16.msra.mxu0 %v544
  %591 = vmatpush.bf16.msra.mxu0 %v540
  %592 = vmatpush.bf16.msra.mxu0 %v536
  %593 = vmatpush.bf16.msra.mxu0 %v532
  %594 = vmatmul.bf16.gmra.mxu0 %v559
  %v595 = vpop.f32.mrf.mxu0
  %v596 = vadd.f32 %v556, %v595
  %v597 = vpop.f32.mrf.mxu0
  %598 = vdwg.mxu0
  %599 = vmatpush.bf16.msra.mxu0 0
  %600 = vmatpush.bf16.msra.mxu0 0
  %601 = vmatpush.bf16.msra.mxu0 0
  %602 = vmatpush.bf16.msra.mxu0 %v568
  %603 = vmatpush.bf16.msra.mxu0 %v545
  %604 = vmatpush.bf16.msra.mxu0 %v541
  %605 = vmatpush.bf16.msra.mxu0 %v537
  %606 = vmatpush.bf16.msra.mxu0 %v533
  %607 = vmatmul.bf16.gmra.mxu0 %v559
  %v608 = vpop.f32.mrf.mxu0
  %v609 = vadd.f32 %v556, %v608
  %v610 = vpop.f32.mrf.mxu0
  %611 = vdwg.mxu0
  %612 = vmatpush.bf16.msra.mxu0 0
  %613 = vmatpush.bf16.msra.mxu0 0
  %614 = vmatpush.bf16.msra.mxu0 0
  %615 = vmatpush.bf16.msra.mxu0 %v571
  %616 = vmatpush.bf16.msra.mxu0 %v546
  %617 = vmatpush.bf16.msra.mxu0 %v542
  %618 = vmatpush.bf16.msra.mxu0 %v538
  %619 = vmatpush.bf16.msra.mxu0 %v534
  %620 = vmatmul.bf16.gmra.mxu0 %v559
  %v621 = vpop.f32.mrf.mxu0
  %v622 = vadd.f32 %v556, %v621
  %v623 = vpop.f32.mrf.mxu0
  %624 = vdwg.mxu0
  %v625 = vmax.f32 %v583, 0.0
  %v626 = vmax.f32 %v596, 0.0
  %v627 = vmax.f32 %v609, 0.0
  %v628 = vmax.f32 %v622, 0.0
  %629 = vrot.lane.b32.xlu0 %v625, 127
  %v630 = vpop.permute.xlu0 %629
  %631 = vrot.lane.b32.xlu0 %v626, 127
  %v632 = vpop.permute.xlu0 %631
  %633 = vrot.lane.b32.xlu0 %v627, 127
  %v634 = vpop.permute.xlu0 %633
  %635 = vrot.lane.b32.xlu0 %v628, 127
  %v636 = vpop.permute.xlu0 %635
  %v637 = vsel %vm199, %v634, %v636
  %v638 = vsel %vm199, %v632, %v634
  %v639 = vsel %vm199, %v630, %v632
  %v640 = vsel %vm199, %v636, %v630
  %v641 = vmax.f32 %v625, %v639
  %v642 = vmax.f32 %v626, %v638
  %v643 = vmax.f32 %v627, %v637
  %v644 = vmax.f32 %v628, %v640
  %645 = vrot.lane.b32.xlu0 %v641, 112
  %v646 = vpop.permute.xlu0 %645
  %647 = vrot.lane.b32.xlu0 %v642, 112
  %v648 = vpop.permute.xlu0 %647
  %649 = vrot.lane.b32.xlu0 %v643, 112
  %v650 = vpop.permute.xlu0 %649
  %651 = vrot.lane.b32.xlu0 %v644, 112
  %v652 = vpop.permute.xlu0 %651
  %v653 = vsel %vm255, %v650, %v652
  %v654 = vsel %vm255, %v648, %v650
  %v655 = vsel %vm255, %v646, %v648
  %v656 = vsel %vm255, %v652, %v646
  %v657 = vmax.f32 %v641, %v655
  %v658 = vmax.f32 %v642, %v654
  %v659 = vmax.f32 %v643, %v653
  %v660 = vmax.f32 %v644, %v656
  %v661 = vpack.c.bf16 %v657, %v657
  %v662 = vpack.c.bf16 %v658, %v658
  %v663 = vpack.c.bf16 %v659, %v659
  %v664 = vpack.c.bf16 %v660, %v660
  %v665 = vld [vmem:[%s9] sm:$0xf]
  %v666 = vld [vmem:[%s9 + $0x4] sm:$0xf]
  %v667 = vld [vmem:[%s9 + $0x8] sm:$0xf]
  %v668 = vld [vmem:[%s9 + $0xc] sm:$0xf]
  %v669 = vld [vmem:[%s9 + $0x10] sm:$0xf]
  %v670 = vld [vmem:[%s9 + $0x14] sm:$0xf]
  %v671 = vld [vmem:[%s9 + $0x18] sm:$0xf]
  %v672 = vld [vmem:[%s9 + $0x1c] sm:$0xf]
  %v673 = vld [vmem:[%s9 + $0x20] sm:$0xf]
  %v674 = vld [vmem:[%s9 + $0x24] sm:$0xf]
  %v675 = vld [vmem:[%s9 + $0x28] sm:$0xf]
  %v676 = vld [vmem:[%s9 + $0x2c] sm:$0xf]
  %v677 = vld [vmem:[%s9 + $0x30] sm:$0xf]
  %v678 = vld [vmem:[%s9 + $0x34] sm:$0xf]
  %v679 = vld [vmem:[%s9 + $0x38] sm:$0xf]
  %v680 = vld [vmem:[%s9 + $0x3c] sm:$0xf]
  %v681 = vld [vmem:[%s9 + $0x40] sm:$0xf]
  %v682 = vld [vmem:[%s9 + $0x44] sm:$0xf]
  %v683 = vld [vmem:[%s9 + $0x48] sm:$0xf]
  %v684 = vld [vmem:[%s9 + $0x4c] sm:$0xf]
  %v685 = vld [vmem:[%s9 + $0x50] sm:$0xf]
  %v686 = vld [vmem:[%s9 + $0x54] sm:$0xf]
  %v687 = vld [vmem:[%s9 + $0x58] sm:$0xf]
  %v688 = vld [vmem:[%s9 + $0x5c] sm:$0xf]
  %v689 = vld [vmem:[%s9 + $0x60] sm:$0xf]
  %v690 = vld [vmem:[%s9 + $0x64] sm:$0xf]
  %v691 = vld [vmem:[%s9 + $0x68] sm:$0xf]
  %v692 = vld [vmem:[%s9 + $0x6c] sm:$0xf]
  %v693 = vld [vmem:[%s9 + $0x70] sm:$0xf]
  %v694 = vld [vmem:[%s9 + $0x74] sm:$0xf]
  %v695 = vld [vmem:[%s9 + $0x78] sm:$0xf]
  %v696 = vld [vmem:[%s9 + $0x7c] sm:$0xf]
  %v697 = vld [vmem:[%s9 + $0x80] sm:$0xf]
  %v698 = vld [vmem:[%s9 + $0x84] sm:$0xf]
  %v699 = vld [vmem:[%s9 + $0x88] sm:$0xf]
  %v700 = vld [vmem:[%s9 + $0x8c] sm:$0xf]
  %v701 = vld [vmem:[%s9 + $0x90] sm:$0xf]
  %v702 = vld [vmem:[%s9 + $0x94] sm:$0xf]
  %v703 = vld [vmem:[%s9 + $0x98] sm:$0xf]
  %v704 = vld [vmem:[%s9 + $0x9c] sm:$0xf]
  %v705 = vld [vmem:[%s9 + $0xa0] sm:$0xf]
  %v706 = vld [vmem:[%s9 + $0xa4] sm:$0xf]
  %v707 = vld [vmem:[%s9 + $0xa8] sm:$0xf]
  %v708 = vld [vmem:[%s9 + $0xac] sm:$0xf]
  %v709 = vld [vmem:[%s9 + $0xb0] sm:$0xf]
  %v710 = vld [vmem:[%s9 + $0xb4] sm:$0xf]
  %v711 = vld [vmem:[%s9 + $0xb8] sm:$0xf]
  %v712 = vld [vmem:[%s9 + $0xbc] sm:$0xf]
  %v713 = vld [vmem:[%s9 + $0xc0] sm:$0xf]
  %v714 = vld [vmem:[%s9 + $0xc4] sm:$0xf]
  %v715 = vld [vmem:[%s9 + $0xc8] sm:$0xf]
  %v716 = vld [vmem:[%s9 + $0xcc] sm:$0xf]
  %v717 = vld [vmem:[%s9 + $0xd0] sm:$0xf]
  %v718 = vld [vmem:[%s9 + $0xd4] sm:$0xf]
  %v719 = vld [vmem:[%s9 + $0xd8] sm:$0xf]
  %v720 = vld [vmem:[%s9 + $0xdc] sm:$0xf]
  %v721 = vld [vmem:[%s9 + $0xe0] sm:$0xf]
  %v722 = vld [vmem:[%s9 + $0xe4] sm:$0xf]
  %v723 = vld [vmem:[%s9 + $0xe8] sm:$0xf]
  %v724 = vld [vmem:[%s9 + $0xec] sm:$0xf]
  %v725 = vld [vmem:[%s9 + $0xf0] sm:$0xf]
  %v726 = vld [vmem:[%s9 + $0xf4] sm:$0xf]
  %v727 = vld [vmem:[%s9 + $0xf8] sm:$0xf]
  %v728 = vld [vmem:[%s9 + $0xfc] sm:$0xf]
  %v793 = vunpack.c.l.b16 %v665
  %v794 = vunpack.c.l.b16 %v666
  %v795 = vunpack.c.l.b16 %v667
  %v796 = vunpack.c.l.b16 %v668
  %v797 = vunpack.c.l.b16 %v669
  %v798 = vunpack.c.l.b16 %v670
  %v799 = vunpack.c.l.b16 %v671
  %v800 = vunpack.c.l.b16 %v672
  %v801 = vunpack.c.l.b16 %v673
  %v802 = vunpack.c.l.b16 %v674
  %v803 = vunpack.c.l.b16 %v675
  %v804 = vunpack.c.l.b16 %v676
  %v805 = vunpack.c.l.b16 %v677
  %v806 = vunpack.c.l.b16 %v678
  %v807 = vunpack.c.l.b16 %v679
  %v808 = vunpack.c.l.b16 %v680
  %v809 = vunpack.c.l.b16 %v681
  %v810 = vunpack.c.l.b16 %v682
  %v811 = vunpack.c.l.b16 %v683
  %v812 = vunpack.c.l.b16 %v684
  %v813 = vunpack.c.l.b16 %v685
  %v814 = vunpack.c.l.b16 %v686
  %v815 = vunpack.c.l.b16 %v687
  %v816 = vunpack.c.l.b16 %v688
  %v817 = vunpack.c.l.b16 %v689
  %v818 = vunpack.c.l.b16 %v690
  %v819 = vunpack.c.l.b16 %v691
  %v820 = vunpack.c.l.b16 %v692
  %v821 = vunpack.c.l.b16 %v693
  %v822 = vunpack.c.l.b16 %v694
  %v823 = vunpack.c.l.b16 %v695
  %v824 = vunpack.c.l.b16 %v696
  %v825 = vunpack.c.l.b16 %v697
  %v826 = vunpack.c.l.b16 %v698
  %v827 = vunpack.c.l.b16 %v699
  %v828 = vunpack.c.l.b16 %v700
  %v829 = vunpack.c.l.b16 %v701
  %v830 = vunpack.c.l.b16 %v702
  %v831 = vunpack.c.l.b16 %v703
  %v832 = vunpack.c.l.b16 %v704
  %v833 = vunpack.c.l.b16 %v705
  %v834 = vunpack.c.l.b16 %v706
  %v835 = vunpack.c.l.b16 %v707
  %v836 = vunpack.c.l.b16 %v708
  %v837 = vunpack.c.l.b16 %v709
  %v838 = vunpack.c.l.b16 %v710
  %v839 = vunpack.c.l.b16 %v711
  %v840 = vunpack.c.l.b16 %v712
  %v841 = vunpack.c.l.b16 %v713
  %v842 = vunpack.c.l.b16 %v714
  %v843 = vunpack.c.l.b16 %v715
  %v844 = vunpack.c.l.b16 %v716
  %v845 = vunpack.c.l.b16 %v717
  %v846 = vunpack.c.l.b16 %v718
  %v847 = vunpack.c.l.b16 %v719
  %v848 = vunpack.c.l.b16 %v720
  %v849 = vunpack.c.l.b16 %v721
  %v850 = vunpack.c.l.b16 %v722
  %v851 = vunpack.c.l.b16 %v723
  %v852 = vunpack.c.l.b16 %v724
  %v853 = vunpack.c.l.b16 %v725
  %v854 = vunpack.c.l.b16 %v726
  %v855 = vunpack.c.l.b16 %v727
  %v856 = vunpack.c.l.b16 %v728
  %v857 = vpack.c.b16 %v794, %v793
  %v858 = vpack.c.b16 %v796, %v795
  %v859 = vpack.c.b16 %v798, %v797
  %v860 = vpack.c.b16 %v800, %v799
  %v861 = vpack.c.b16 %v802, %v801
  %v862 = vpack.c.b16 %v804, %v803
  %v863 = vpack.c.b16 %v806, %v805
  %v864 = vpack.c.b16 %v808, %v807
  %v865 = vpack.c.b16 %v810, %v809
  %v866 = vpack.c.b16 %v812, %v811
  %v867 = vpack.c.b16 %v814, %v813
  %v868 = vpack.c.b16 %v816, %v815
  %v869 = vpack.c.b16 %v818, %v817
  %v870 = vpack.c.b16 %v820, %v819
  %v871 = vpack.c.b16 %v822, %v821
  %v872 = vpack.c.b16 %v824, %v823
  %v873 = vpack.c.b16 %v826, %v825
  %v874 = vpack.c.b16 %v828, %v827
  %v875 = vpack.c.b16 %v830, %v829
  %v876 = vpack.c.b16 %v832, %v831
  %v877 = vpack.c.b16 %v834, %v833
  %v878 = vpack.c.b16 %v836, %v835
  %v879 = vpack.c.b16 %v838, %v837
  %v880 = vpack.c.b16 %v840, %v839
  %v881 = vpack.c.b16 %v842, %v841
  %v882 = vpack.c.b16 %v844, %v843
  %v883 = vpack.c.b16 %v846, %v845
  %v884 = vpack.c.b16 %v848, %v847
  %v885 = vpack.c.b16 %v850, %v849
  %v886 = vpack.c.b16 %v852, %v851
  %v887 = vpack.c.b16 %v854, %v853
  %v888 = vpack.c.b16 %v856, %v855
  %921 = vmatpush.bf16.msra.mxu0 %v864
  %922 = vmatpush.bf16.msra.mxu0 %v863
  %923 = vmatpush.bf16.msra.mxu0 %v862
  %924 = vmatpush.bf16.msra.mxu0 %v861
  %925 = vmatpush.bf16.msra.mxu0 %v860
  %926 = vmatpush.bf16.msra.mxu0 %v859
  %927 = vmatpush.bf16.msra.mxu0 %v858
  %928 = vmatpush.bf16.msra.mxu0 %v857
  %929 = vmatmul.bf16.gmra.mxu0 %v661
  %v930 = vpop.f32.mrf.mxu0
  %v931 = vadd.f32 0.0, %v930
  %v932 = vpop.f32.mrf.mxu0
  %933 = vdwg.mxu0
  %934 = vmatpush.bf16.msra.mxu0 %v872
  %935 = vmatpush.bf16.msra.mxu0 %v871
  %936 = vmatpush.bf16.msra.mxu0 %v870
  %937 = vmatpush.bf16.msra.mxu0 %v869
  %938 = vmatpush.bf16.msra.mxu0 %v868
  %939 = vmatpush.bf16.msra.mxu0 %v867
  %940 = vmatpush.bf16.msra.mxu0 %v866
  %941 = vmatpush.bf16.msra.mxu0 %v865
  %942 = vmatmul.bf16.gmra.mxu0 %v662
  %v943 = vpop.f32.mrf.mxu0
  %v944 = vadd.f32 %v931, %v943
  %v945 = vpop.f32.mrf.mxu0
  %946 = vdwg.mxu0
  %947 = vmatpush.bf16.msra.mxu0 %v880
  %948 = vmatpush.bf16.msra.mxu0 %v879
  %949 = vmatpush.bf16.msra.mxu0 %v878
  %950 = vmatpush.bf16.msra.mxu0 %v877
  %951 = vmatpush.bf16.msra.mxu0 %v876
  %952 = vmatpush.bf16.msra.mxu0 %v875
  %953 = vmatpush.bf16.msra.mxu0 %v874
  %954 = vmatpush.bf16.msra.mxu0 %v873
  %955 = vmatmul.bf16.gmra.mxu0 %v663
  %v956 = vpop.f32.mrf.mxu0
  %v957 = vadd.f32 %v944, %v956
  %v958 = vpop.f32.mrf.mxu0
  %959 = vdwg.mxu0
  %960 = vmatpush.bf16.msra.mxu0 %v888
  %961 = vmatpush.bf16.msra.mxu0 %v887
  %962 = vmatpush.bf16.msra.mxu0 %v886
  %963 = vmatpush.bf16.msra.mxu0 %v885
  %964 = vmatpush.bf16.msra.mxu0 %v884
  %965 = vmatpush.bf16.msra.mxu0 %v883
  %966 = vmatpush.bf16.msra.mxu0 %v882
  %967 = vmatpush.bf16.msra.mxu0 %v881
  %968 = vmatmul.bf16.gmra.mxu0 %v664
  %v969 = vpop.f32.mrf.mxu0
  %v970 = vadd.f32 %v957, %v969
  %v971 = vpop.f32.mrf.mxu0
  %972 = vdwg.mxu0
  %973 = vrot.lane.b32.xlu0 %v970, 9
  %v974 = vpop.permute.xlu0 %973
  %v975 = vld [vmem:[%s8] sm:$0x1]
  %v976 = vperm.slane %v975, 0
  %v977 = vmul.f32 %v974, %v976
  %978 = vrot.lane.b32.xlu0 %v970, 8
  %v979 = vpop.permute.xlu0 %978
  %v980 = vld [vmem:[%s8 + $0x1] sm:$0x1]
  %v981 = vperm.slane %v980, 0
  %v982 = vmul.f32 %v979, %v981
  %983 = vrot.lane.b32.xlu0 %v970, 7
  %v984 = vpop.permute.xlu0 %983
  %v985 = vld [vmem:[%s8 + $0x2] sm:$0x1]
  %v986 = vperm.slane %v985, 0
  %v987 = vmul.f32 %v984, %v986
  %988 = vrot.lane.b32.xlu0 %v970, 1
  %v989 = vpop.permute.xlu0 %988
  %v990 = vld [vmem:[%s8 + $0x3] sm:$0x1]
  %v991 = vperm.slane %v990, 0
  %v992 = vmul.f32 %v989, %v991
  %993 = vrot.lane.b32.xlu0 %v970, 127
  %v994 = vpop.permute.xlu0 %993
  %v995 = vld [vmem:[%s8 + $0x5] sm:$0x1]
  %v996 = vperm.slane %v995, 0
  %v997 = vmul.f32 %v994, %v996
  %998 = vrot.lane.b32.xlu0 %v970, 121
  %v999 = vpop.permute.xlu0 %998
  %v1000 = vld [vmem:[%s8 + $0x6] sm:$0x1]
  %v1001 = vperm.slane %v1000, 0
  %v1002 = vmul.f32 %v999, %v1001
  %1003 = vrot.lane.b32.xlu0 %v970, 120
  %v1004 = vpop.permute.xlu0 %1003
  %v1005 = vld [vmem:[%s8 + $0x7] sm:$0x1]
  %v1006 = vperm.slane %v1005, 0
  %v1007 = vmul.f32 %v1004, %v1006
  %1008 = vrot.lane.b32.xlu0 %v970, 119
  %v1009 = vpop.permute.xlu0 %1008
  %v1010 = vld [vmem:[%s8 + $0x8] sm:$0x1]
  %v1011 = vperm.slane %v1010, 0
  %v1012 = vmul.f32 %v1009, %v1011
  %v1013 = vpack.c.bf16 %v982, %v977
  %v1014 = vpack.c.bf16 %v992, %v987
  %v1015 = vpack.c.bf16 %v997, %v970
  %v1016 = vpack.c.bf16 %v1007, %v1002
  %v1017 = vpack.c.bf16 %v1012, %v1012
  %v1018 = vld [vmem:[%s5] sm:$0xf]
  %v1019 = vld [vmem:[%s5 + $0x4] sm:$0xf]
  %v1020 = vld [vmem:[%s6] sm:$0xff]
  %v1021 = vld [vmem:[%s6 + $0x8] sm:$0xff]
  %1023 = vset.pattern.permute.xlu0 0
  %1024 = vperm.xlu0 %1023, %v1020
  %v1025 = vpop.permute.xlu0 %1024
  %1028 = vset.pattern.permute.xlu0 0
  %1029 = vperm.xlu0 %1028, %v1021
  %v1030 = vpop.permute.xlu0 %1029
  %v1034 = vunpack.c.l.b16 %v1018
  %v1035 = vunpack.c.l.b16 %v1019
  %v1036 = vpack.c.b16 %v1035, %v1034
  %v1038 = vsel %vm330, %v1036, 0
  %v1041 = vsel %vm334, %v1017, 0
  %1043 = vmatpush.bf16.msra.mxu0 0
  %1044 = vmatpush.bf16.msra.mxu0 0
  %1045 = vmatpush.bf16.msra.mxu0 0
  %1046 = vmatpush.bf16.msra.mxu0 %v1041
  %1047 = vmatpush.bf16.msra.mxu0 %v1016
  %1048 = vmatpush.bf16.msra.mxu0 %v1015
  %1049 = vmatpush.bf16.msra.mxu0 %v1014
  %1050 = vmatpush.bf16.msra.mxu0 %v1013
  %1051 = vmatmul.bf16.gmra.mxu0 %v1038
  %v1052 = vpop.f32.mrf.mxu0
  %v1053 = vadd.f32 %v1025, %v1052
  %v1054 = vpop.f32.mrf.mxu0
  %v1055 = vadd.f32 %v1030, %v1054
  %1056 = vdwg.mxu0
  %v1057 = vmax.f32 %v1053, 0.0
  %v1058 = vmax.f32 %v1055, 0.0
  %1059 = vrot.lane.b32.xlu0 %v1057, 127
  %v1060 = vpop.permute.xlu0 %1059
  %1061 = vrot.lane.b32.xlu0 %v1058, 127
  %v1062 = vpop.permute.xlu0 %1061
  %v1063 = vmax.f32 %v1057, %v1060
  %v1064 = vmax.f32 %v1058, %v1062
  %1065 = vrot.lane.b32.xlu0 %v1063, 120
  %v1066 = vpop.permute.xlu0 %1065
  %1067 = vrot.lane.b32.xlu0 %v1064, 120
  %v1068 = vpop.permute.xlu0 %1067
  %v1069 = vmax.f32 %v1063, %v1066
  %v1070 = vmax.f32 %v1064, %v1068
  %v1071 = vpack.c.bf16 %v1070, %v1069
  %v1072 = vld [vmem:[%s10] sm:$0xf]
  %v1073 = vld [vmem:[%s10 + $0x4] sm:$0xf]
  %v1074 = vld [vmem:[%s10 + $0x8] sm:$0xf]
  %v1075 = vld [vmem:[%s10 + $0xc] sm:$0xf]
  %v1076 = vld [vmem:[%s10 + $0x10] sm:$0xf]
  %v1077 = vld [vmem:[%s10 + $0x14] sm:$0xf]
  %v1078 = vld [vmem:[%s10 + $0x18] sm:$0xf]
  %v1079 = vld [vmem:[%s10 + $0x1c] sm:$0xf]
  %v1080 = vld [vmem:[%s10 + $0x20] sm:$0xf]
  %v1081 = vld [vmem:[%s10 + $0x24] sm:$0xf]
  %v1082 = vld [vmem:[%s10 + $0x28] sm:$0xf]
  %v1083 = vld [vmem:[%s10 + $0x2c] sm:$0xf]
  %v1084 = vld [vmem:[%s10 + $0x30] sm:$0xf]
  %v1085 = vld [vmem:[%s10 + $0x34] sm:$0xf]
  %v1086 = vld [vmem:[%s10 + $0x38] sm:$0xf]
  %v1087 = vld [vmem:[%s10 + $0x3c] sm:$0xf]
  %v1104 = vunpack.c.l.b16 %v1072
  %v1105 = vunpack.c.l.b16 %v1073
  %v1106 = vunpack.c.l.b16 %v1074
  %v1107 = vunpack.c.l.b16 %v1075
  %v1108 = vunpack.c.l.b16 %v1076
  %v1109 = vunpack.c.l.b16 %v1077
  %v1110 = vunpack.c.l.b16 %v1078
  %v1111 = vunpack.c.l.b16 %v1079
  %v1112 = vunpack.c.l.b16 %v1080
  %v1113 = vunpack.c.l.b16 %v1081
  %v1114 = vunpack.c.l.b16 %v1082
  %v1115 = vunpack.c.l.b16 %v1083
  %v1116 = vunpack.c.l.b16 %v1084
  %v1117 = vunpack.c.l.b16 %v1085
  %v1118 = vunpack.c.l.b16 %v1086
  %v1119 = vunpack.c.l.b16 %v1087
  %v1120 = vpack.c.b16 %v1105, %v1104
  %v1121 = vpack.c.b16 %v1107, %v1106
  %v1122 = vpack.c.b16 %v1109, %v1108
  %v1123 = vpack.c.b16 %v1111, %v1110
  %v1124 = vpack.c.b16 %v1113, %v1112
  %v1125 = vpack.c.b16 %v1115, %v1114
  %v1126 = vpack.c.b16 %v1117, %v1116
  %v1127 = vpack.c.b16 %v1119, %v1118
  %1136 = vmatpush.bf16.msra.mxu0 %v1127
  %1137 = vmatpush.bf16.msra.mxu0 %v1126
  %1138 = vmatpush.bf16.msra.mxu0 %v1125
  %1139 = vmatpush.bf16.msra.mxu0 %v1124
  %1140 = vmatpush.bf16.msra.mxu0 %v1123
  %1141 = vmatpush.bf16.msra.mxu0 %v1122
  %1142 = vmatpush.bf16.msra.mxu0 %v1121
  %1143 = vmatpush.bf16.msra.mxu0 %v1120
  %1144 = vmatmul.bf16.gmra.mxu0 %v1071
  %v1145 = vpop.f32.mrf.mxu0
  %v1146 = vadd.f32 0.0, %v1145
  %v1147 = vpop.f32.mrf.mxu0
  %v1148 = vadd.f32 0.0, %v1147
  %1149 = vdwg.mxu0
  %1152 = vrot.lane.b32.xlu0 %v1146, 126
  %v1153 = vpop.permute.xlu0 %1152
  %1154 = vrot.lane.b32.xlu0 %v1148, 126
  %v1155 = vpop.permute.xlu0 %1154
  %1158 = vrot.lane.b32.xlu0 %v1146, 124
  %v1159 = vpop.permute.xlu0 %1158
  %1160 = vrot.lane.b32.xlu0 %v1148, 124
  %v1161 = vpop.permute.xlu0 %1160
  %1164 = vrot.lane.b32.xlu0 %v1146, 122
  %v1165 = vpop.permute.xlu0 %1164
  %1166 = vrot.lane.b32.xlu0 %v1148, 122
  %v1167 = vpop.permute.xlu0 %1166
  %v1170 = vld [vmem:[%s11] sm:$0xff]
  %v1171 = vld [vmem:[%s11 + $0x8] sm:$0xff]
  %v1172 = vld [vmem:[%s11 + $0x10] sm:$0xff]
  %v1173 = vld [vmem:[%s11 + $0x18] sm:$0xff]
  %v1174 = vld [vmem:[%s12] sm:$0xff]
  %v1175 = vld [vmem:[%s12 + $0x8] sm:$0xff]
  %v1176 = vld [vmem:[%s12 + $0x10] sm:$0xff]
  %v1177 = vld [vmem:[%s12 + $0x18] sm:$0xff]
  %1179 = vset.pattern.permute.xlu0 0
  %1180 = vperm.xlu0 %1179, %v1174
  %v1181 = vpop.permute.xlu0 %1180
  %1184 = vset.pattern.permute.xlu0 0
  %1185 = vperm.xlu0 %1184, %v1175
  %v1186 = vpop.permute.xlu0 %1185
  %1189 = vset.pattern.permute.xlu0 0
  %1190 = vperm.xlu0 %1189, %v1176
  %v1191 = vpop.permute.xlu0 %1190
  %1194 = vset.pattern.permute.xlu0 0
  %1195 = vperm.xlu0 %1194, %v1177
  %v1196 = vpop.permute.xlu0 %1195
  %vm1198 = vcmask 523264
  %v1200 = vsel %vm1198, %v1170, 0
  %v1203 = vsel %vm1198, %v1171, 0
  %v1206 = vsel %vm1198, %v1172, 0
  %v1209 = vsel %vm1198, %v1173, 0
  %1211 = vmatpush.msra.mxu0 0.0
  %1212 = vmatpush.msra.mxu0 0.0
  %1213 = vmatpush.msra.mxu0 0.0
  %1214 = vmatpush.msra.mxu0 0.0
  %1215 = vmatpush.msra.mxu0 0.0
  %1216 = vmatpush.msra.mxu0 0.0
  %1217 = vmatpush.msra.mxu0 0.0
  %1218 = vmatpush.msra.mxu0 0.0
  %1219 = vmatpush.msra.mxu0 %v1167
  %1220 = vmatpush.msra.mxu0 %v1165
  %1221 = vmatpush.msra.mxu0 %v1161
  %1222 = vmatpush.msra.mxu0 %v1159
  %1223 = vmatpush.msra.mxu0 %v1155
  %1224 = vmatpush.msra.mxu0 %v1153
  %1225 = vmatpush.msra.mxu0 %v1148
  %1226 = vmatpush.msra.mxu0 %v1146
  %1227 = vmatmul.f32.gmra.mxu0 %v1200
  %v1228 = vpop.f32.mrf.mxu0
  %v1229 = vadd.f32 %v1181, %v1228
  %1230 = vmatmul.f32.gmra.mxu0 %v1203
  %v1231 = vpop.f32.mrf.mxu0
  %v1232 = vadd.f32 %v1186, %v1231
  %1233 = vmatmul.f32.gmra.mxu0 %v1206
  %v1234 = vpop.f32.mrf.mxu0
  %v1235 = vadd.f32 %v1191, %v1234
  %1236 = vmatmul.f32.gmra.mxu0 %v1209
  %v1237 = vpop.f32.mrf.mxu0
  %v1238 = vadd.f32 %v1196, %v1237
  %1239 = vdwg.mxu0
  %vm1240 = vcmask 15360
  %v1241 = vsel %vm1240, %v1229, 0.0
  %1242 = vadd.xlane.f32.xlu0 %v1241
  %v1243 = vpop.xlane.xlu0 %1242
  %v1244 = vsel %vm1240, %v1232, 0.0
  %1245 = vadd.xlane.f32.xlu0 %v1244
  %v1246 = vpop.xlane.xlu0 %1245
  %v1247 = vsel %vm1240, %v1235, 0.0
  %1248 = vadd.xlane.f32.xlu0 %v1247
  %v1249 = vpop.xlane.xlu0 %1248
  %v1250 = vsel %vm1240, %v1238, 0.0
  %1251 = vadd.xlane.f32.xlu0 %v1250
  %v1252 = vpop.xlane.xlu0 %1251
  %v1253 = vrcp.pop 2.0
  %v1254 = vmul.f32 2.0, %v1253
  %v1255 = vsub.f32 1.0, %v1254
  %v1256 = vmul.f32 %v1253, %v1255
  %v1257 = vadd.f32 %v1253, %v1256
  %vm1258 = vweird.f32 %v1253
  %v1259 = vsel %vm1258, %v1253, %v1257
  %v1260 = vmul.f32 %v1243, %v1259
  %v1261 = vmul.f32 %v1246, %v1259
  %v1262 = vmul.f32 %v1249, %v1259
  %v1263 = vmul.f32 %v1252, %v1259
  %v1264 = vsub.f32 %v1229, %v1260
  %v1265 = vsub.f32 %v1232, %v1261
  %v1266 = vsub.f32 %v1235, %v1262
  %v1267 = vsub.f32 %v1238, %v1263
  %v1268 = vmul.f32 %v1264, %v1264
  %v1269 = vmul.f32 %v1265, %v1265
  %v1270 = vmul.f32 %v1266, %v1266
  %v1271 = vmul.f32 %v1267, %v1267
  %v1272 = vsel %vm1240, %v1268, 0.0
  %1273 = vadd.xlane.f32.xlu0 %v1272
  %v1274 = vpop.xlane.xlu0 %1273
  %v1275 = vsel %vm1240, %v1269, 0.0
  %1276 = vadd.xlane.f32.xlu0 %v1275
  %v1277 = vpop.xlane.xlu0 %1276
  %v1278 = vsel %vm1240, %v1270, 0.0
  %1279 = vadd.xlane.f32.xlu0 %v1278
  %v1280 = vpop.xlane.xlu0 %1279
  %v1281 = vsel %vm1240, %v1271, 0.0
  %1282 = vadd.xlane.f32.xlu0 %v1281
  %v1283 = vpop.xlane.xlu0 %1282
  %v1284 = vmul.f32 %v1274, %v1259
  %v1285 = vmul.f32 %v1277, %v1259
  %v1286 = vmul.f32 %v1280, %v1259
  %v1287 = vmul.f32 %v1283, %v1259
  %v1288 = vadd.f32 %v1284, 1e-05
  %v1289 = vadd.f32 %v1285, 1e-05
  %v1290 = vadd.f32 %v1286, 1e-05
  %v1291 = vadd.f32 %v1287, 1e-05
  %v1292 = vrsqrt.pop %v1288
  %v1293 = vmul.f32 %v1292, %v1288
  %v1294 = vmul.f32 %v1293, %v1292
  %v1295 = vmul.f32 0.5, %v1294
  %v1296 = vsub.f32 1.5, %v1295
  %v1297 = vmul.f32 %v1292, %v1296
  %vm1298 = vweird.f32 %v1288
  %vm1299 = vweird.f32 %v1292
  %vm1300 = vmor %vm1298, %vm1299
  %v1301 = vsel %vm1300, %v1292, %v1297
  %v1302 = vrsqrt.pop %v1289
  %v1303 = vmul.f32 %v1302, %v1289
  %v1304 = vmul.f32 %v1303, %v1302
  %v1305 = vmul.f32 0.5, %v1304
  %v1306 = vsub.f32 1.5, %v1305
  %v1307 = vmul.f32 %v1302, %v1306
  %vm1308 = vweird.f32 %v1289
  %vm1309 = vweird.f32 %v1302
  %vm1310 = vmor %vm1308, %vm1309
  %v1311 = vsel %vm1310, %v1302, %v1307
  %v1312 = vrsqrt.pop %v1290
  %v1313 = vmul.f32 %v1312, %v1290
  %v1314 = vmul.f32 %v1313, %v1312
  %v1315 = vmul.f32 0.5, %v1314
  %v1316 = vsub.f32 1.5, %v1315
  %v1317 = vmul.f32 %v1312, %v1316
  %vm1318 = vweird.f32 %v1290
  %vm1319 = vweird.f32 %v1312
  %vm1320 = vmor %vm1318, %vm1319
  %v1321 = vsel %vm1320, %v1312, %v1317
  %v1322 = vrsqrt.pop %v1291
  %v1323 = vmul.f32 %v1322, %v1291
  %v1324 = vmul.f32 %v1323, %v1322
  %v1325 = vmul.f32 0.5, %v1324
  %v1326 = vsub.f32 1.5, %v1325
  %v1327 = vmul.f32 %v1322, %v1326
  %vm1328 = vweird.f32 %v1291
  %vm1329 = vweird.f32 %v1322
  %vm1330 = vmor %vm1328, %vm1329
  %v1331 = vsel %vm1330, %v1322, %v1327
  %v1332 = vmul.f32 %v1264, %v1301
  %v1333 = vmul.f32 %v1265, %v1311
  %v1334 = vmul.f32 %v1266, %v1321
  %v1335 = vmul.f32 %v1267, %v1331
  %v1336 = vld [vmem:[%s13] sm:$0xff]
  %v1337 = vld [vmem:[%s13 + $0x8] sm:$0xff]
  %v1338 = vld [vmem:[%s13 + $0x10] sm:$0xff]
  %v1339 = vld [vmem:[%s13 + $0x18] sm:$0xff]
  %1341 = vset.pattern.permute.xlu0 0
  %1342 = vperm.xlu0 %1341, %v1336
  %v1343 = vpop.permute.xlu0 %1342
  %1346 = vset.pattern.permute.xlu0 0
  %1347 = vperm.xlu0 %1346, %v1337
  %v1348 = vpop.permute.xlu0 %1347
  %1351 = vset.pattern.permute.xlu0 0
  %1352 = vperm.xlu0 %1351, %v1338
  %v1353 = vpop.permute.xlu0 %1352
  %1356 = vset.pattern.permute.xlu0 0
  %1357 = vperm.xlu0 %1356, %v1339
  %v1358 = vpop.permute.xlu0 %1357
  %v1360 = vmul.f32 %v1332, %v1343
  %v1361 = vmul.f32 %v1333, %v1348
  %v1362 = vmul.f32 %v1334, %v1353
  %v1363 = vmul.f32 %v1335, %v1358
  %v1364 = vld [vmem:[%s14] sm:$0xff]
  %v1365 = vld [vmem:[%s14 + $0x8] sm:$0xff]
  %v1366 = vld [vmem:[%s14 + $0x10] sm:$0xff]
  %v1367 = vld [vmem:[%s14 + $0x18] sm:$0xff]
  %1369 = vset.pattern.permute.xlu0 0
  %1370 = vperm.xlu0 %1369, %v1364
  %v1371 = vpop.permute.xlu0 %1370
  %1374 = vset.pattern.permute.xlu0 0
  %1375 = vperm.xlu0 %1374, %v1365
  %v1376 = vpop.permute.xlu0 %1375
  %1379 = vset.pattern.permute.xlu0 0
  %1380 = vperm.xlu0 %1379, %v1366
  %v1381 = vpop.permute.xlu0 %1380
  %1384 = vset.pattern.permute.xlu0 0
  %1385 = vperm.xlu0 %1384, %v1367
  %v1386 = vpop.permute.xlu0 %1385
  %v1388 = vadd.f32 %v1360, %v1371
  %v1389 = vadd.f32 %v1361, %v1376
  %v1390 = vadd.f32 %v1362, %v1381
  %v1391 = vadd.f32 %v1363, %v1386
  %1392 = vst.msk [vmem:[%s15] sm:$0xff] %vm1240, %v1388
  %1393 = vst.msk [vmem:[%s15 + $0x8] sm:$0xff] %vm1240, %v1389
  %1394 = vst.msk [vmem:[%s15 + $0x10] sm:$0xff] %vm1240, %v1390
  %1395 = vst.msk [vmem:[%s15 + $0x18] sm:$0xff] %vm1240, %v1391
  // Predicated region
  $region62: #{encoder_cnn_forward.1} parent=0 // pred_check
    _
  $region63: #{encoder_cnn_forward.1} parent=0 // pred_check_branch
    %1397 = sbr.rel (0) target = $region65
  $region64: #{encoder_cnn_forward.1} parent=0 // pred_region
    _
  $region65: #{encoder_cnn_forward.1} parent=0 // pred_fallthru
    _
  // Predicated region
  $region66: #{encoder_cnn_forward.1} parent=0 // pred_check
    _
  $region67: #{encoder_cnn_forward.1} parent=0 // pred_check_branch
    %1399 = sbr.rel (0) target = $region69
  $region68: #{encoder_cnn_forward.1} parent=0 // pred_region
    _
  $region69: #{encoder_cnn_forward.1} parent=0 // pred_fallthru
    _

</llo_original>
